<compile_context>
chip_gen: v5e
topology: v5e:2x2
jax: 0.10.0
libtpu: 0.0.40
codegen_flags: <defaults>
</compile_context>

<pallas_src>
import functools

import jax
import jax.numpy as jnp
import numpy as np
from jax import lax
from jax.experimental import pallas as pl
from jax.experimental.pallas import tpu as pltpu


# ---------------------------------------------------------------------------
# Shared LSTM cell on a lane-dense (Bp, 4H) gate slab, single-tanh sigmoid.
#   is_g : (Bp, 4H) bool  — True on the g-gate lanes [2H, 3H)
#   pre  : (Bp, 4H) f32   — 1.0 on g lanes, 0.5 elsewhere (tanh half-angle)
# ---------------------------------------------------------------------------
def _lstm_cell(gates, c, *, H, is_g, pre):
    t = jnp.tanh(gates * pre)                       # one EUP pass over the slab
    act = jnp.where(is_g, t, 0.5 * t + 0.5)         # sigmoid via tanh identity
    i_g = act[:, 0 * H:1 * H]
    f_g = act[:, 1 * H:2 * H]
    g_g = act[:, 2 * H:3 * H]
    o_g = act[:, 3 * H:4 * H]
    c_new = f_g * c + i_g * g_g
    h_new = o_g * jnp.tanh(c_new)
    return h_new, c_new


def _gate_constants(Bp, H):
    lane = lax.broadcasted_iota(jnp.int32, (Bp, 4 * H), 1)
    is_g = (lane >= 2 * H) & (lane < 3 * H)
    pre = jnp.where(is_g, jnp.float32(1.0), jnp.float32(0.5))
    return is_g, pre


# ---------------------------------------------------------------------------
# Specialized 2-layer wavefront kernel (layer 1 trails layer 0 by one step).
# ---------------------------------------------------------------------------
def wavefront2_kernel(x_ref, wih0_ref, b0_ref, wbig_ref, b1_ref,
                      fcw_ref, fcb_ref, out_ref, gx_scr, *, H, T, Bp):
    # Hoisted layer-0 input projection (+ combined bias) for the whole
    # sequence: one (T*Bp, in) @ (in, 4H) MXU call before the recurrence.
    gx_scr[...] = (
        jnp.dot(x_ref[...], wih0_ref[...], preferred_element_type=jnp.float32)
        + b0_ref[...]
    )

    w_big = wbig_ref[...]                                    # (2H, 8H) resident
    b1 = jnp.broadcast_to(b1_ref[...], (Bp, 4 * H))          # hoisted broadcast
    is_g, pre = _gate_constants(Bp, H)                       # hoisted constants
    zeros = jnp.zeros((Bp, H), jnp.float32)

    # s = 0: layer-0 step 0 (h_{-1} = 0, so the recurrent matmul vanishes).
    h0, c0 = _lstm_cell(gx_scr[pl.ds(0, Bp), :], zeros, H=H, is_g=is_g, pre=pre)
    h1, c1 = zeros, zeros

    # s = 1 .. T-1: layer-0 step s and layer-1 step s-1 share a single
    # (Bp, 2H) @ (2H, 8H) matmul:
    #   LHS = [h0_{s-1} | h1_{s-2}],  RHS = [[Whh0^T, Wih1^T], [0, Whh1^T]]
    def wstep(s, carry):
        h0, c0, h1, c1 = carry
        start = pl.multiple_of(s * Bp, Bp)
        lhs = jnp.concatenate([h0, h1], axis=1)                       # (Bp, 2H)
        mm = jnp.dot(lhs, w_big, preferred_element_type=jnp.float32)  # (Bp, 8H)
        g0 = mm[:, :4 * H] + gx_scr[pl.ds(start, Bp), :]
        g1 = mm[:, 4 * H:] + b1
        h0n, c0n = _lstm_cell(g0, c0, H=H, is_g=is_g, pre=pre)
        h1n, c1n = _lstm_cell(g1, c1, H=H, is_g=is_g, pre=pre)
        return (h0n, c0n, h1n, c1n)

    unroll = True if T <= 16 else 8
    h0, c0, h1, c1 = lax.fori_loop(1, T, wstep, (h0, c0, h1, c1), unroll=unroll)

    # s = T: final layer-1 step T-1 (consumes h0_{T-1}, h1_{T-2}).
    lhs = jnp.concatenate([h0, h1], axis=1)
    g1 = jnp.dot(lhs, w_big[:, 4 * H:], preferred_element_type=jnp.float32) + b1
    h1, _ = _lstm_cell(g1, c1, H=H, is_g=is_g, pre=pre)

    # Fused final Linear on the last timestep's hidden state (layer 1).
    out_ref[...] = (
        jnp.dot(h1, fcw_ref[...], preferred_element_type=jnp.float32)
        + fcb_ref[...]
    )


# ---------------------------------------------------------------------------
# Generic stacked-layer kernel (any num_layers != 2): sequential layers with
# hoisted input projection per layer; hidden sequence kept in VMEM scratch.
# ---------------------------------------------------------------------------
def stacked_lstm_kernel(*refs, num_layers, H, T, Bp):
    x_ref = refs[0]
    idx = 1
    layer_refs = []
    for _ in range(num_layers):
        layer_refs.append((refs[idx], refs[idx + 1], refs[idx + 2]))
        idx += 3
    fcw_ref = refs[idx]
    fcb_ref = refs[idx + 1]
    out_ref = refs[idx + 2]
    seq_scr = refs[idx + 3]
    gx_scr = refs[idx + 4]

    is_g, pre = _gate_constants(Bp, H)          # hoisted out of steps & layers
    unroll = True if T <= 16 else 8

    h_last = None
    for layer in range(num_layers):
        wih_ref, whh_ref, b_ref = layer_refs[layer]
        is_last = layer == num_layers - 1
        src_ref = x_ref if layer == 0 else seq_scr

        # Hoisted input projection for the whole sequence.
        gx_scr[...] = (
            jnp.dot(src_ref[...], wih_ref[...],
                    preferred_element_type=jnp.float32)
            + b_ref[...]
        )
        whh = whh_ref[...]                       # (H, 4H) resident across loop

        def step(t, carry, _whh=whh, _is_last=is_last):
            h, c = carry
            start = pl.multiple_of(t * Bp, Bp)
            gates = (gx_scr[pl.ds(start, Bp), :]
                     + jnp.dot(h, _whh, preferred_element_type=jnp.float32))
            h_new, c_new = _lstm_cell(gates, c, H=H, is_g=is_g, pre=pre)
            if not _is_last:
                seq_scr[pl.ds(start, Bp), :] = h_new
            return (h_new, c_new)

        h0 = jnp.zeros((Bp, H), jnp.float32)
        c0 = jnp.zeros((Bp, H), jnp.float32)
        h_last, _ = lax.fori_loop(0, T, step, (h0, c0), unroll=unroll)

    out_ref[...] = (
        jnp.dot(h_last, fcw_ref[...], preferred_element_type=jnp.float32)
        + fcb_ref[...]
    )


# ---------------------------------------------------------------------------
# Parameter init (deterministic, PyTorch-style uniform(-1/sqrt(H), 1/sqrt(H))).
# ---------------------------------------------------------------------------
def init_params(key, input_size, hidden_size, num_layers, output_size):
    k = 1.0 / np.sqrt(hidden_size)
    params = {"lstm": []}
    for layer in range(num_layers):
        in_feat = input_size if layer == 0 else hidden_size
        key, k1, k2, k3, k4 = jax.random.split(key, 5)
        w_ih = jax.random.uniform(k1, (4 * hidden_size, in_feat), jnp.float32, -k, k)
        w_hh = jax.random.uniform(k2, (4 * hidden_size, hidden_size), jnp.float32, -k, k)
        b_ih = jax.random.uniform(k3, (4 * hidden_size,), jnp.float32, -k, k)
        b_hh = jax.random.uniform(k4, (4 * hidden_size,), jnp.float32, -k, k)
        params["lstm"].append((w_ih, w_hh, b_ih, b_hh))
    key, k5, k6 = jax.random.split(key, 3)
    params["fc_w"] = jax.random.uniform(k5, (output_size, hidden_size), jnp.float32, -k, k)
    params["fc_b"] = jax.random.uniform(k6, (output_size,), jnp.float32, -k, k)
    return params


# ---------------------------------------------------------------------------
# One-time parameter preprocessing into kernel layout (perf feedback: keep
# per-call work down to x layout + pallas_call).
# ---------------------------------------------------------------------------
def prepare_params(params):
    layers = []
    for (w_ih, w_hh, b_ih, b_hh) in params["lstm"]:
        layers.append((w_ih.T, w_hh.T, (b_ih + b_hh).reshape(1, -1)))
    out_size = params["fc_w"].shape[0]
    prepped = {
        "layers": tuple(layers),
        "fc_w_t": params["fc_w"].T,
        "fc_b": params["fc_b"].reshape(1, out_size),
    }
    if len(layers) == 2:
        _, whh0_t, _ = layers[0]
        wih1_t, whh1_t, _ = layers[1]
        # Fused wavefront weight (2H, 8H): [[Whh0^T, Wih1^T], [0, Whh1^T]]
        top = jnp.concatenate([whh0_t, wih1_t], axis=1)
        bot = jnp.concatenate([jnp.zeros_like(whh1_t), whh1_t], axis=1)
        prepped["w_big"] = jnp.concatenate([top, bot], axis=0)
    return prepped


# ---------------------------------------------------------------------------
# Forward pass: x layout plumbing + one fused Pallas kernel.
# ---------------------------------------------------------------------------
def stock_rnn_forward(x_bti, prepped):
    """x_bti: (B, T, input_size) -> (B, output_size)."""
    B, T, in_size = x_bti.shape
    layers = prepped["layers"]
    num_layers = len(layers)
    H = layers[0][1].shape[0]              # whh_t: (H, 4H)
    out_size = prepped["fc_w_t"].shape[1]

    # Pad batch to a multiple of 8 sublanes; time-major then flatten so the
    # hoisted input projection is one matmul.
    Bp = ((B + 7) // 8) * 8
    x_tb = jnp.transpose(x_bti, (1, 0, 2))                 # (T, B, in)
    x_tb = jnp.pad(x_tb, ((0, 0), (0, Bp - B), (0, 0)))    # (T, Bp, in)
    x_flat = x_tb.reshape(T * Bp, in_size)

    if num_layers == 2:
        kernel = functools.partial(wavefront2_kernel, H=H, T=T, Bp=Bp)
        out_pad = pl.pallas_call(
            kernel,
            out_shape=jax.ShapeDtypeStruct((Bp, out_size), jnp.float32),
            scratch_shapes=[
                pltpu.VMEM((T * Bp, 4 * H), jnp.float32),   # hoisted gates_x (layer 0)
            ],
        )(x_flat, layers[0][0], layers[0][2], prepped["w_big"],
          layers[1][2], prepped["fc_w_t"], prepped["fc_b"])
    else:
        kernel = functools.partial(
            stacked_lstm_kernel, num_layers=num_layers, H=H, T=T, Bp=Bp)
        args = [x_flat]
        for (wih_t, whh_t, b) in layers:
            args += [wih_t, whh_t, b]
        args += [prepped["fc_w_t"], prepped["fc_b"]]
        out_pad = pl.pallas_call(
            kernel,
            out_shape=jax.ShapeDtypeStruct((Bp, out_size), jnp.float32),
            scratch_shapes=[
                pltpu.VMEM((T * Bp, H), jnp.float32),        # hidden sequence
                pltpu.VMEM((T * Bp, 4 * H), jnp.float32),    # hoisted gates_x
            ],
        )(*args)
    return out_pad[:B]


# ---------------------------------------------------------------------------
# Pure-JAX reference (faithful to PyTorch LSTM + Linear) for validation.
# ---------------------------------------------------------------------------
def reference_forward(x_bti, params, hidden_size):
    B = x_bti.shape[0]
    seq = x_bti
    for (w_ih, w_hh, b_ih, b_hh) in params["lstm"]:
        h = jnp.zeros((B, hidden_size), jnp.float32)
        c = jnp.zeros((B, hidden_size), jnp.float32)
        outs = []
        for t in range(seq.shape[1]):
            g = seq[:, t, :] @ w_ih.T + b_ih + h @ w_hh.T + b_hh
            i_g = jax.nn.sigmoid(g[:, 0 * hidden_size:1 * hidden_size])
            f_g = jax.nn.sigmoid(g[:, 1 * hidden_size:2 * hidden_size])
            g_g = jnp.tanh(g[:, 2 * hidden_size:3 * hidden_size])
            o_g = jax.nn.sigmoid(g[:, 3 * hidden_size:4 * hidden_size])
            c = f_g * c + i_g * g_g
            h = o_g * jnp.tanh(c)
            outs.append(h)
        seq = jnp.stack(outs, axis=1)
    return seq[:, -1, :] @ params["fc_w"].T + params["fc_b"]


if __name__ == "__main__":
    # StockRNN(input_size=4, hidden_size=32, num_layers=2, output_size=1),
    # batch=2, seq=8.
    B, T = 2, 8
    input_size, hidden_size, num_layers, output_size = 4, 32, 2, 1

    key = jax.random.PRNGKey(0)
    key, xk = jax.random.split(key)
    x = jax.random.normal(xk, (B, T, input_size), jnp.float32)

    params = init_params(key, input_size, hidden_size, num_layers, output_size)
    prepped = prepare_params(params)               # one-time weight layout prep

    fwd = jax.jit(stock_rnn_forward)
    out = fwd(x, prepped)
    out = jax.block_until_ready(out)

    ref = reference_forward(x, params, hidden_size)
    assert out.shape == (B, output_size)
    np.testing.assert_allclose(np.asarray(out), np.asarray(ref),
                               rtol=2e-4, atol=2e-4)
    print("KERNEL_OK")
</pallas_src>

<mosaic_0001>
module attributes {stable_mosaic.version = 11 : i64} {
  func.func @wavefront2_kernel(%arg0: memref<64x4xf32, #tpu.memory_space<vmem>>, %arg1: memref<4x128xf32, #tpu.memory_space<vmem>>, %arg2: memref<1x128xf32, #tpu.memory_space<vmem>>, %arg3: memref<64x256xf32, #tpu.memory_space<vmem>>, %arg4: memref<1x128xf32, #tpu.memory_space<vmem>>, %arg5: memref<32x1xf32, #tpu.memory_space<vmem>>, %arg6: memref<1x1xf32, #tpu.memory_space<vmem>>, %arg7: memref<8x1xf32, #tpu.memory_space<vmem>>, %arg8: memref<64x128xf32, #tpu.memory_space<vmem>>) attributes {dimension_semantics = [], scalar_prefetch = 0 : i64, scratch_operands = 1 : i64, tpu.core_type = #tpu.core_type<tc>} {
    %c0 = arith.constant 0 : index
    %c0_0 = arith.constant 0 : index
    %0 = vector.load %arg0[%c0, %c0_0] : memref<64x4xf32, #tpu.memory_space<vmem>>, vector<64x4xf32>
    %c0_1 = arith.constant 0 : index
    %c0_2 = arith.constant 0 : index
    %1 = vector.load %arg1[%c0_1, %c0_2] : memref<4x128xf32, #tpu.memory_space<vmem>>, vector<4x128xf32>
    %cst = arith.constant dense<0.000000e+00> : vector<64x128xf32>
    %2 = tpu.matmul %0, %1, %cst {dimension_numbers = #tpu.dot_dimension_numbers<[1], [0], [0], [1], [0, 0, 1, 1], [], []>} : vector<64x4xf32>, vector<4x128xf32>, vector<64x128xf32> -> vector<64x128xf32>
    %c0_3 = arith.constant 0 : index
    %c0_4 = arith.constant 0 : index
    %3 = vector.load %arg2[%c0_3, %c0_4] : memref<1x128xf32, #tpu.memory_space<vmem>>, vector<1x128xf32>
    %4 = vector.broadcast %3 : vector<1x128xf32> to vector<64x128xf32>
    %5 = arith.addf %2, %4 : vector<64x128xf32>
    %c0_5 = arith.constant 0 : index
    %c0_6 = arith.constant 0 : index
    %6 = vector.load %arg8[%c0_5, %c0_6] : memref<64x128xf32, #tpu.memory_space<vmem>>, vector<64x128xf32>
    tpu.vector_store %arg8[%c0_5, %c0_6], %5 {strides = array<i32>} : memref<64x128xf32, #tpu.memory_space<vmem>>, vector<64x128xf32>,
    %c0_7 = arith.constant 0 : index
    %c0_8 = arith.constant 0 : index
    %7 = vector.load %arg3[%c0_7, %c0_8] : memref<64x256xf32, #tpu.memory_space<vmem>>, vector<64x256xf32>
    %c0_9 = arith.constant 0 : index
    %c0_10 = arith.constant 0 : index
    %8 = vector.load %arg4[%c0_9, %c0_10] : memref<1x128xf32, #tpu.memory_space<vmem>>, vector<1x128xf32>
    %9 = vector.shape_cast %8 : vector<1x128xf32> to vector<1x128xf32>
    %10 = vector.broadcast %9 : vector<1x128xf32> to vector<8x128xf32>
    %11 = tpu.iota {dimensions = array<i32: 1>} : vector<8x128xi32>
    %c64_i32 = arith.constant 64 : i32
    %12 = vector.broadcast %c64_i32 : i32 to vector<8x128xi32>
    %13 = arith.cmpi sge, %11, %12 : vector<8x128xi32>
    %c96_i32 = arith.constant 96 : i32
    %14 = vector.broadcast %c96_i32 : i32 to vector<8x128xi32>
    %15 = arith.cmpi slt, %11, %14 : vector<8x128xi32>
    %16 = arith.andi %13, %15 : vector<8x128xi1>
    %cst_11 = arith.constant 1.000000e+00 : f32
    %cst_12 = arith.constant 5.000000e-01 : f32
    %17 = vector.broadcast %cst_11 : f32 to vector<8x128xf32>
    %18 = vector.broadcast %cst_12 : f32 to vector<8x128xf32>
    %19 = arith.select %16, %17, %18 : vector<8x128xi1>, vector<8x128xf32>
    %cst_13 = arith.constant 0.000000e+00 : f32
    %20 = vector.broadcast %cst_13 : f32 to vector<8x32xf32>
    %c0_14 = arith.constant 0 : index
    %c0_15 = arith.constant 0 : index
    %21 = vector.load %arg8[%c0_14, %c0_15] : memref<64x128xf32, #tpu.memory_space<vmem>>, vector<8x128xf32>
    %22 = arith.mulf %21, %19 : vector<8x128xf32>
    %23 = math.tanh %22 : vector<8x128xf32>
    %cst_16 = arith.constant 5.000000e-01 : f32
    %24 = vector.broadcast %cst_16 : f32 to vector<8x128xf32>
    %25 = arith.mulf %24, %23 : vector<8x128xf32>
    %cst_17 = arith.constant 5.000000e-01 : f32
    %26 = vector.broadcast %cst_17 : f32 to vector<8x128xf32>
    %27 = arith.addf %25, %26 : vector<8x128xf32>
    %28 = arith.select %16, %23, %27 : vector<8x128xi1>, vector<8x128xf32>
    %29 = vector.extract_strided_slice %28 {offsets = [0, 0], sizes = [8, 32], strides = [1, 1]} : vector<8x128xf32> to vector<8x32xf32>
    %30 = vector.extract_strided_slice %28 {offsets = [0, 32], sizes = [8, 32], strides = [1, 1]} : vector<8x128xf32> to vector<8x32xf32>
    %31 = vector.extract_strided_slice %28 {offsets = [0, 64], sizes = [8, 32], strides = [1, 1]} : vector<8x128xf32> to vector<8x32xf32>
    %32 = vector.extract_strided_slice %28 {offsets = [0, 96], sizes = [8, 32], strides = [1, 1]} : vector<8x128xf32> to vector<8x32xf32>
    %33 = arith.mulf %30, %20 : vector<8x32xf32>
    %34 = arith.mulf %29, %31 : vector<8x32xf32>
    %35 = arith.addf %33, %34 : vector<8x32xf32>
    %36 = math.tanh %35 : vector<8x32xf32>
    %37 = arith.mulf %32, %36 : vector<8x32xf32>
    %c1_i32 = arith.constant 1 : i32
    %c8_i32 = arith.constant 8 : i32
    %38 = arith.muli %c1_i32, %c8_i32 : i32
    %39 = tpu.assume_multiple %38, 8 : i32
    %40 = tpu.concatenate %37, %20 in 1 : vector<8x32xf32>, vector<8x32xf32> -> vector<8x64xf32>
    %cst_18 = arith.constant dense<0.000000e+00> : vector<8x256xf32>
    %41 = tpu.matmul %40, %7, %cst_18 {dimension_numbers = #tpu.dot_dimension_numbers<[1], [0], [0], [1], [0, 0, 1, 1], [], []>} : vector<8x64xf32>, vector<64x256xf32>, vector<8x256xf32> -> vector<8x256xf32>
    %42 = vector.extract_strided_slice %41 {offsets = [0, 0], sizes = [8, 128], strides = [1, 1]} : vector<8x256xf32> to vector<8x128xf32>
    %43 = arith.index_cast %39 : i32 to index
    %c0_19 = arith.constant 0 : index
    %44 = vector.load %arg8[%43, %c0_19] : memref<64x128xf32, #tpu.memory_space<vmem>>, vector<8x128xf32>
    %45 = arith.addf %42, %44 : vector<8x128xf32>
    %46 = vector.extract_strided_slice %41 {offsets = [0, 128], sizes = [8, 128], strides = [1, 1]} : vector<8x256xf32> to vector<8x128xf32>
    %47 = arith.addf %46, %10 : vector<8x128xf32>
    %48 = arith.mulf %45, %19 : vector<8x128xf32>
    %49 = math.tanh %48 : vector<8x128xf32>
    %cst_20 = arith.constant 5.000000e-01 : f32
    %50 = vector.broadcast %cst_20 : f32 to vector<8x128xf32>
    %51 = arith.mulf %50, %49 : vector<8x128xf32>
    %cst_21 = arith.constant 5.000000e-01 : f32
    %52 = vector.broadcast %cst_21 : f32 to vector<8x128xf32>
    %53 = arith.addf %51, %52 : vector<8x128xf32>
    %54 = arith.select %16, %49, %53 : vector<8x128xi1>, vector<8x128xf32>
    %55 = vector.extract_strided_slice %54 {offsets = [0, 0], sizes = [8, 32], strides = [1, 1]} : vector<8x128xf32> to vector<8x32xf32>
    %56 = vector.extract_strided_slice %54 {offsets = [0, 32], sizes = [8, 32], strides = [1, 1]} : vector<8x128xf32> to vector<8x32xf32>
    %57 = vector.extract_strided_slice %54 {offsets = [0, 64], sizes = [8, 32], strides = [1, 1]} : vector<8x128xf32> to vector<8x32xf32>
    %58 = vector.extract_strided_slice %54 {offsets = [0, 96], sizes = [8, 32], strides = [1, 1]} : vector<8x128xf32> to vector<8x32xf32>
    %59 = arith.mulf %56, %35 : vector<8x32xf32>
    %60 = arith.mulf %55, %57 : vector<8x32xf32>
    %61 = arith.addf %59, %60 : vector<8x32xf32>
    %62 = math.tanh %61 : vector<8x32xf32>
    %63 = arith.mulf %58, %62 : vector<8x32xf32>
    %64 = arith.mulf %47, %19 : vector<8x128xf32>
    %65 = math.tanh %64 : vector<8x128xf32>
    %cst_22 = arith.constant 5.000000e-01 : f32
    %66 = vector.broadcast %cst_22 : f32 to vector<8x128xf32>
    %67 = arith.mulf %66, %65 : vector<8x128xf32>
    %cst_23 = arith.constant 5.000000e-01 : f32
    %68 = vector.broadcast %cst_23 : f32 to vector<8x128xf32>
    %69 = arith.addf %67, %68 : vector<8x128xf32>
    %70 = arith.select %16, %65, %69 : vector<8x128xi1>, vector<8x128xf32>
    %71 = vector.extract_strided_slice %70 {offsets = [0, 0], sizes = [8, 32], strides = [1, 1]} : vector<8x128xf32> to vector<8x32xf32>
    %72 = vector.extract_strided_slice %70 {offsets = [0, 32], sizes = [8, 32], strides = [1, 1]} : vector<8x128xf32> to vector<8x32xf32>
    %73 = vector.extract_strided_slice %70 {offsets = [0, 64], sizes = [8, 32], strides = [1, 1]} : vector<8x128xf32> to vector<8x32xf32>
    %74 = vector.extract_strided_slice %70 {offsets = [0, 96], sizes = [8, 32], strides = [1, 1]} : vector<8x128xf32> to vector<8x32xf32>
    %75 = arith.mulf %72, %20 : vector<8x32xf32>
    %76 = arith.mulf %71, %73 : vector<8x32xf32>
    %77 = arith.addf %75, %76 : vector<8x32xf32>
    %78 = math.tanh %77 : vector<8x32xf32>
    %79 = arith.mulf %74, %78 : vector<8x32xf32>
    %c2_i32 = arith.constant 2 : i32
    %c8_i32_24 = arith.constant 8 : i32
    %80 = arith.muli %c2_i32, %c8_i32_24 : i32
    %81 = tpu.assume_multiple %80, 8 : i32
    %82 = tpu.concatenate %63, %79 in 1 : vector<8x32xf32>, vector<8x32xf32> -> vector<8x64xf32>
    %cst_25 = arith.constant dense<0.000000e+00> : vector<8x256xf32>
    %83 = tpu.matmul %82, %7, %cst_25 {dimension_numbers = #tpu.dot_dimension_numbers<[1], [0], [0], [1], [0, 0, 1, 1], [], []>} : vector<8x64xf32>, vector<64x256xf32>, vector<8x256xf32> -> vector<8x256xf32>
    %84 = vector.extract_strided_slice %83 {offsets = [0, 0], sizes = [8, 128], strides = [1, 1]} : vector<8x256xf32> to vector<8x128xf32>
    %85 = arith.index_cast %81 : i32 to index
    %c0_26 = arith.constant 0 : index
    %86 = vector.load %arg8[%85, %c0_26] : memref<64x128xf32, #tpu.memory_space<vmem>>, vector<8x128xf32>
    %87 = arith.addf %84, %86 : vector<8x128xf32>
    %88 = vector.extract_strided_slice %83 {offsets = [0, 128], sizes = [8, 128], strides = [1, 1]} : vector<8x256xf32> to vector<8x128xf32>
    %89 = arith.addf %88, %10 : vector<8x128xf32>
    %90 = arith.mulf %87, %19 : vector<8x128xf32>
    %91 = math.tanh %90 : vector<8x128xf32>
    %cst_27 = arith.constant 5.000000e-01 : f32
    %92 = vector.broadcast %cst_27 : f32 to vector<8x128xf32>
    %93 = arith.mulf %92, %91 : vector<8x128xf32>
    %cst_28 = arith.constant 5.000000e-01 : f32
    %94 = vector.broadcast %cst_28 : f32 to vector<8x128xf32>
    %95 = arith.addf %93, %94 : vector<8x128xf32>
    %96 = arith.select %16, %91, %95 : vector<8x128xi1>, vector<8x128xf32>
    %97 = vector.extract_strided_slice %96 {offsets = [0, 0], sizes = [8, 32], strides = [1, 1]} : vector<8x128xf32> to vector<8x32xf32>
    %98 = vector.extract_strided_slice %96 {offsets = [0, 32], sizes = [8, 32], strides = [1, 1]} : vector<8x128xf32> to vector<8x32xf32>
    %99 = vector.extract_strided_slice %96 {offsets = [0, 64], sizes = [8, 32], strides = [1, 1]} : vector<8x128xf32> to vector<8x32xf32>
    %100 = vector.extract_strided_slice %96 {offsets = [0, 96], sizes = [8, 32], strides = [1, 1]} : vector<8x128xf32> to vector<8x32xf32>
    %101 = arith.mulf %98, %61 : vector<8x32xf32>
    %102 = arith.mulf %97, %99 : vector<8x32xf32>
    %103 = arith.addf %101, %102 : vector<8x32xf32>
    %104 = math.tanh %103 : vector<8x32xf32>
    %105 = arith.mulf %100, %104 : vector<8x32xf32>
    %106 = arith.mulf %89, %19 : vector<8x128xf32>
    %107 = math.tanh %106 : vector<8x128xf32>
    %cst_29 = arith.constant 5.000000e-01 : f32
    %108 = vector.broadcast %cst_29 : f32 to vector<8x128xf32>
    %109 = arith.mulf %108, %107 : vector<8x128xf32>
    %cst_30 = arith.constant 5.000000e-01 : f32
    %110 = vector.broadcast %cst_30 : f32 to vector<8x128xf32>
    %111 = arith.addf %109, %110 : vector<8x128xf32>
    %112 = arith.select %16, %107, %111 : vector<8x128xi1>, vector<8x128xf32>
    %113 = vector.extract_strided_slice %112 {offsets = [0, 0], sizes = [8, 32], strides = [1, 1]} : vector<8x128xf32> to vector<8x32xf32>
    %114 = vector.extract_strided_slice %112 {offsets = [0, 32], sizes = [8, 32], strides = [1, 1]} : vector<8x128xf32> to vector<8x32xf32>
    %115 = vector.extract_strided_slice %112 {offsets = [0, 64], sizes = [8, 32], strides = [1, 1]} : vector<8x128xf32> to vector<8x32xf32>
    %116 = vector.extract_strided_slice %112 {offsets = [0, 96], sizes = [8, 32], strides = [1, 1]} : vector<8x128xf32> to vector<8x32xf32>
    %117 = arith.mulf %114, %77 : vector<8x32xf32>
    %118 = arith.mulf %113, %115 : vector<8x32xf32>
    %119 = arith.addf %117, %118 : vector<8x32xf32>
    %120 = math.tanh %119 : vector<8x32xf32>
    %121 = arith.mulf %116, %120 : vector<8x32xf32>
    %c3_i32 = arith.constant 3 : i32
    %c8_i32_31 = arith.constant 8 : i32
    %122 = arith.muli %c3_i32, %c8_i32_31 : i32
    %123 = tpu.assume_multiple %122, 8 : i32
    %124 = tpu.concatenate %105, %121 in 1 : vector<8x32xf32>, vector<8x32xf32> -> vector<8x64xf32>
    %cst_32 = arith.constant dense<0.000000e+00> : vector<8x256xf32>
    %125 = tpu.matmul %124, %7, %cst_32 {dimension_numbers = #tpu.dot_dimension_numbers<[1], [0], [0], [1], [0, 0, 1, 1], [], []>} : vector<8x64xf32>, vector<64x256xf32>, vector<8x256xf32> -> vector<8x256xf32>
    %126 = vector.extract_strided_slice %125 {offsets = [0, 0], sizes = [8, 128], strides = [1, 1]} : vector<8x256xf32> to vector<8x128xf32>
    %127 = arith.index_cast %123 : i32 to index
    %c0_33 = arith.constant 0 : index
    %128 = vector.load %arg8[%127, %c0_33] : memref<64x128xf32, #tpu.memory_space<vmem>>, vector<8x128xf32>
    %129 = arith.addf %126, %128 : vector<8x128xf32>
    %130 = vector.extract_strided_slice %125 {offsets = [0, 128], sizes = [8, 128], strides = [1, 1]} : vector<8x256xf32> to vector<8x128xf32>
    %131 = arith.addf %130, %10 : vector<8x128xf32>
    %132 = arith.mulf %129, %19 : vector<8x128xf32>
    %133 = math.tanh %132 : vector<8x128xf32>
    %cst_34 = arith.constant 5.000000e-01 : f32
    %134 = vector.broadcast %cst_34 : f32 to vector<8x128xf32>
    %135 = arith.mulf %134, %133 : vector<8x128xf32>
    %cst_35 = arith.constant 5.000000e-01 : f32
    %136 = vector.broadcast %cst_35 : f32 to vector<8x128xf32>
    %137 = arith.addf %135, %136 : vector<8x128xf32>
    %138 = arith.select %16, %133, %137 : vector<8x128xi1>, vector<8x128xf32>
    %139 = vector.extract_strided_slice %138 {offsets = [0, 0], sizes = [8, 32], strides = [1, 1]} : vector<8x128xf32> to vector<8x32xf32>
    %140 = vector.extract_strided_slice %138 {offsets = [0, 32], sizes = [8, 32], strides = [1, 1]} : vector<8x128xf32> to vector<8x32xf32>
    %141 = vector.extract_strided_slice %138 {offsets = [0, 64], sizes = [8, 32], strides = [1, 1]} : vector<8x128xf32> to vector<8x32xf32>
    %142 = vector.extract_strided_slice %138 {offsets = [0, 96], sizes = [8, 32], strides = [1, 1]} : vector<8x128xf32> to vector<8x32xf32>
    %143 = arith.mulf %140, %103 : vector<8x32xf32>
    %144 = arith.mulf %139, %141 : vector<8x32xf32>
    %145 = arith.addf %143, %144 : vector<8x32xf32>
    %146 = math.tanh %145 : vector<8x32xf32>
    %147 = arith.mulf %142, %146 : vector<8x32xf32>
    %148 = arith.mulf %131, %19 : vector<8x128xf32>
    %149 = math.tanh %148 : vector<8x128xf32>
    %cst_36 = arith.constant 5.000000e-01 : f32
    %150 = vector.broadcast %cst_36 : f32 to vector<8x128xf32>
    %151 = arith.mulf %150, %149 : vector<8x128xf32>
    %cst_37 = arith.constant 5.000000e-01 : f32
    %152 = vector.broadcast %cst_37 : f32 to vector<8x128xf32>
    %153 = arith.addf %151, %152 : vector<8x128xf32>
    %154 = arith.select %16, %149, %153 : vector<8x128xi1>, vector<8x128xf32>
    %155 = vector.extract_strided_slice %154 {offsets = [0, 0], sizes = [8, 32], strides = [1, 1]} : vector<8x128xf32> to vector<8x32xf32>
    %156 = vector.extract_strided_slice %154 {offsets = [0, 32], sizes = [8, 32], strides = [1, 1]} : vector<8x128xf32> to vector<8x32xf32>
    %157 = vector.extract_strided_slice %154 {offsets = [0, 64], sizes = [8, 32], strides = [1, 1]} : vector<8x128xf32> to vector<8x32xf32>
    %158 = vector.extract_strided_slice %154 {offsets = [0, 96], sizes = [8, 32], strides = [1, 1]} : vector<8x128xf32> to vector<8x32xf32>
    %159 = arith.mulf %156, %119 : vector<8x32xf32>
    %160 = arith.mulf %155, %157 : vector<8x32xf32>
    %161 = arith.addf %159, %160 : vector<8x32xf32>
    %162 = math.tanh %161 : vector<8x32xf32>
    %163 = arith.mulf %158, %162 : vector<8x32xf32>
    %c4_i32 = arith.constant 4 : i32
    %c8_i32_38 = arith.constant 8 : i32
    %164 = arith.muli %c4_i32, %c8_i32_38 : i32
    %165 = tpu.assume_multiple %164, 8 : i32
    %166 = tpu.concatenate %147, %163 in 1 : vector<8x32xf32>, vector<8x32xf32> -> vector<8x64xf32>
    %cst_39 = arith.constant dense<0.000000e+00> : vector<8x256xf32>
    %167 = tpu.matmul %166, %7, %cst_39 {dimension_numbers = #tpu.dot_dimension_numbers<[1], [0], [0], [1], [0, 0, 1, 1], [], []>} : vector<8x64xf32>, vector<64x256xf32>, vector<8x256xf32> -> vector<8x256xf32>
    %168 = vector.extract_strided_slice %167 {offsets = [0, 0], sizes = [8, 128], strides = [1, 1]} : vector<8x256xf32> to vector<8x128xf32>
    %169 = arith.index_cast %165 : i32 to index
    %c0_40 = arith.constant 0 : index
    %170 = vector.load %arg8[%169, %c0_40] : memref<64x128xf32, #tpu.memory_space<vmem>>, vector<8x128xf32>
    %171 = arith.addf %168, %170 : vector<8x128xf32>
    %172 = vector.extract_strided_slice %167 {offsets = [0, 128], sizes = [8, 128], strides = [1, 1]} : vector<8x256xf32> to vector<8x128xf32>
    %173 = arith.addf %172, %10 : vector<8x128xf32>
    %174 = arith.mulf %171, %19 : vector<8x128xf32>
    %175 = math.tanh %174 : vector<8x128xf32>
    %cst_41 = arith.constant 5.000000e-01 : f32
    %176 = vector.broadcast %cst_41 : f32 to vector<8x128xf32>
    %177 = arith.mulf %176, %175 : vector<8x128xf32>
    %cst_42 = arith.constant 5.000000e-01 : f32
    %178 = vector.broadcast %cst_42 : f32 to vector<8x128xf32>
    %179 = arith.addf %177, %178 : vector<8x128xf32>
    %180 = arith.select %16, %175, %179 : vector<8x128xi1>, vector<8x128xf32>
    %181 = vector.extract_strided_slice %180 {offsets = [0, 0], sizes = [8, 32], strides = [1, 1]} : vector<8x128xf32> to vector<8x32xf32>
    %182 = vector.extract_strided_slice %180 {offsets = [0, 32], sizes = [8, 32], strides = [1, 1]} : vector<8x128xf32> to vector<8x32xf32>
    %183 = vector.extract_strided_slice %180 {offsets = [0, 64], sizes = [8, 32], strides = [1, 1]} : vector<8x128xf32> to vector<8x32xf32>
    %184 = vector.extract_strided_slice %180 {offsets = [0, 96], sizes = [8, 32], strides = [1, 1]} : vector<8x128xf32> to vector<8x32xf32>
    %185 = arith.mulf %182, %145 : vector<8x32xf32>
    %186 = arith.mulf %181, %183 : vector<8x32xf32>
    %187 = arith.addf %185, %186 : vector<8x32xf32>
    %188 = math.tanh %187 : vector<8x32xf32>
    %189 = arith.mulf %184, %188 : vector<8x32xf32>
    %190 = arith.mulf %173, %19 : vector<8x128xf32>
    %191 = math.tanh %190 : vector<8x128xf32>
    %cst_43 = arith.constant 5.000000e-01 : f32
    %192 = vector.broadcast %cst_43 : f32 to vector<8x128xf32>
    %193 = arith.mulf %192, %191 : vector<8x128xf32>
    %cst_44 = arith.constant 5.000000e-01 : f32
    %194 = vector.broadcast %cst_44 : f32 to vector<8x128xf32>
    %195 = arith.addf %193, %194 : vector<8x128xf32>
    %196 = arith.select %16, %191, %195 : vector<8x128xi1>, vector<8x128xf32>
    %197 = vector.extract_strided_slice %196 {offsets = [0, 0], sizes = [8, 32], strides = [1, 1]} : vector<8x128xf32> to vector<8x32xf32>
    %198 = vector.extract_strided_slice %196 {offsets = [0, 32], sizes = [8, 32], strides = [1, 1]} : vector<8x128xf32> to vector<8x32xf32>
    %199 = vector.extract_strided_slice %196 {offsets = [0, 64], sizes = [8, 32], strides = [1, 1]} : vector<8x128xf32> to vector<8x32xf32>
    %200 = vector.extract_strided_slice %196 {offsets = [0, 96], sizes = [8, 32], strides = [1, 1]} : vector<8x128xf32> to vector<8x32xf32>
    %201 = arith.mulf %198, %161 : vector<8x32xf32>
    %202 = arith.mulf %197, %199 : vector<8x32xf32>
    %203 = arith.addf %201, %202 : vector<8x32xf32>
    %204 = math.tanh %203 : vector<8x32xf32>
    %205 = arith.mulf %200, %204 : vector<8x32xf32>
    %c5_i32 = arith.constant 5 : i32
    %c8_i32_45 = arith.constant 8 : i32
    %206 = arith.muli %c5_i32, %c8_i32_45 : i32
    %207 = tpu.assume_multiple %206, 8 : i32
    %208 = tpu.concatenate %189, %205 in 1 : vector<8x32xf32>, vector<8x32xf32> -> vector<8x64xf32>
    %cst_46 = arith.constant dense<0.000000e+00> : vector<8x256xf32>
    %209 = tpu.matmul %208, %7, %cst_46 {dimension_numbers = #tpu.dot_dimension_numbers<[1], [0], [0], [1], [0, 0, 1, 1], [], []>} : vector<8x64xf32>, vector<64x256xf32>, vector<8x256xf32> -> vector<8x256xf32>
    %210 = vector.extract_strided_slice %209 {offsets = [0, 0], sizes = [8, 128], strides = [1, 1]} : vector<8x256xf32> to vector<8x128xf32>
    %211 = arith.index_cast %207 : i32 to index
    %c0_47 = arith.constant 0 : index
    %212 = vector.load %arg8[%211, %c0_47] : memref<64x128xf32, #tpu.memory_space<vmem>>, vector<8x128xf32>
    %213 = arith.addf %210, %212 : vector<8x128xf32>
    %214 = vector.extract_strided_slice %209 {offsets = [0, 128], sizes = [8, 128], strides = [1, 1]} : vector<8x256xf32> to vector<8x128xf32>
    %215 = arith.addf %214, %10 : vector<8x128xf32>
    %216 = arith.mulf %213, %19 : vector<8x128xf32>
    %217 = math.tanh %216 : vector<8x128xf32>
    %cst_48 = arith.constant 5.000000e-01 : f32
    %218 = vector.broadcast %cst_48 : f32 to vector<8x128xf32>
    %219 = arith.mulf %218, %217 : vector<8x128xf32>
    %cst_49 = arith.constant 5.000000e-01 : f32
    %220 = vector.broadcast %cst_49 : f32 to vector<8x128xf32>
    %221 = arith.addf %219, %220 : vector<8x128xf32>
    %222 = arith.select %16, %217, %221 : vector<8x128xi1>, vector<8x128xf32>
    %223 = vector.extract_strided_slice %222 {offsets = [0, 0], sizes = [8, 32], strides = [1, 1]} : vector<8x128xf32> to vector<8x32xf32>
    %224 = vector.extract_strided_slice %222 {offsets = [0, 32], sizes = [8, 32], strides = [1, 1]} : vector<8x128xf32> to vector<8x32xf32>
    %225 = vector.extract_strided_slice %222 {offsets = [0, 64], sizes = [8, 32], strides = [1, 1]} : vector<8x128xf32> to vector<8x32xf32>
    %226 = vector.extract_strided_slice %222 {offsets = [0, 96], sizes = [8, 32], strides = [1, 1]} : vector<8x128xf32> to vector<8x32xf32>
    %227 = arith.mulf %224, %187 : vector<8x32xf32>
    %228 = arith.mulf %223, %225 : vector<8x32xf32>
    %229 = arith.addf %227, %228 : vector<8x32xf32>
    %230 = math.tanh %229 : vector<8x32xf32>
    %231 = arith.mulf %226, %230 : vector<8x32xf32>
    %232 = arith.mulf %215, %19 : vector<8x128xf32>
    %233 = math.tanh %232 : vector<8x128xf32>
    %cst_50 = arith.constant 5.000000e-01 : f32
    %234 = vector.broadcast %cst_50 : f32 to vector<8x128xf32>
    %235 = arith.mulf %234, %233 : vector<8x128xf32>
    %cst_51 = arith.constant 5.000000e-01 : f32
    %236 = vector.broadcast %cst_51 : f32 to vector<8x128xf32>
    %237 = arith.addf %235, %236 : vector<8x128xf32>
    %238 = arith.select %16, %233, %237 : vector<8x128xi1>, vector<8x128xf32>
    %239 = vector.extract_strided_slice %238 {offsets = [0, 0], sizes = [8, 32], strides = [1, 1]} : vector<8x128xf32> to vector<8x32xf32>
    %240 = vector.extract_strided_slice %238 {offsets = [0, 32], sizes = [8, 32], strides = [1, 1]} : vector<8x128xf32> to vector<8x32xf32>
    %241 = vector.extract_strided_slice %238 {offsets = [0, 64], sizes = [8, 32], strides = [1, 1]} : vector<8x128xf32> to vector<8x32xf32>
    %242 = vector.extract_strided_slice %238 {offsets = [0, 96], sizes = [8, 32], strides = [1, 1]} : vector<8x128xf32> to vector<8x32xf32>
    %243 = arith.mulf %240, %203 : vector<8x32xf32>
    %244 = arith.mulf %239, %241 : vector<8x32xf32>
    %245 = arith.addf %243, %244 : vector<8x32xf32>
    %246 = math.tanh %245 : vector<8x32xf32>
    %247 = arith.mulf %242, %246 : vector<8x32xf32>
    %c6_i32 = arith.constant 6 : i32
    %c8_i32_52 = arith.constant 8 : i32
    %248 = arith.muli %c6_i32, %c8_i32_52 : i32
    %249 = tpu.assume_multiple %248, 8 : i32
    %250 = tpu.concatenate %231, %247 in 1 : vector<8x32xf32>, vector<8x32xf32> -> vector<8x64xf32>
    %cst_53 = arith.constant dense<0.000000e+00> : vector<8x256xf32>
    %251 = tpu.matmul %250, %7, %cst_53 {dimension_numbers = #tpu.dot_dimension_numbers<[1], [0], [0], [1], [0, 0, 1, 1], [], []>} : vector<8x64xf32>, vector<64x256xf32>, vector<8x256xf32> -> vector<8x256xf32>
    %252 = vector.extract_strided_slice %251 {offsets = [0, 0], sizes = [8, 128], strides = [1, 1]} : vector<8x256xf32> to vector<8x128xf32>
    %253 = arith.index_cast %249 : i32 to index
    %c0_54 = arith.constant 0 : index
    %254 = vector.load %arg8[%253, %c0_54] : memref<64x128xf32, #tpu.memory_space<vmem>>, vector<8x128xf32>
    %255 = arith.addf %252, %254 : vector<8x128xf32>
    %256 = vector.extract_strided_slice %251 {offsets = [0, 128], sizes = [8, 128], strides = [1, 1]} : vector<8x256xf32> to vector<8x128xf32>
    %257 = arith.addf %256, %10 : vector<8x128xf32>
    %258 = arith.mulf %255, %19 : vector<8x128xf32>
    %259 = math.tanh %258 : vector<8x128xf32>
    %cst_55 = arith.constant 5.000000e-01 : f32
    %260 = vector.broadcast %cst_55 : f32 to vector<8x128xf32>
    %261 = arith.mulf %260, %259 : vector<8x128xf32>
    %cst_56 = arith.constant 5.000000e-01 : f32
    %262 = vector.broadcast %cst_56 : f32 to vector<8x128xf32>
    %263 = arith.addf %261, %262 : vector<8x128xf32>
    %264 = arith.select %16, %259, %263 : vector<8x128xi1>, vector<8x128xf32>
    %265 = vector.extract_strided_slice %264 {offsets = [0, 0], sizes = [8, 32], strides = [1, 1]} : vector<8x128xf32> to vector<8x32xf32>
    %266 = vector.extract_strided_slice %264 {offsets = [0, 32], sizes = [8, 32], strides = [1, 1]} : vector<8x128xf32> to vector<8x32xf32>
    %267 = vector.extract_strided_slice %264 {offsets = [0, 64], sizes = [8, 32], strides = [1, 1]} : vector<8x128xf32> to vector<8x32xf32>
    %268 = vector.extract_strided_slice %264 {offsets = [0, 96], sizes = [8, 32], strides = [1, 1]} : vector<8x128xf32> to vector<8x32xf32>
    %269 = arith.mulf %266, %229 : vector<8x32xf32>
    %270 = arith.mulf %265, %267 : vector<8x32xf32>
    %271 = arith.addf %269, %270 : vector<8x32xf32>
    %272 = math.tanh %271 : vector<8x32xf32>
    %273 = arith.mulf %268, %272 : vector<8x32xf32>
    %274 = arith.mulf %257, %19 : vector<8x128xf32>
    %275 = math.tanh %274 : vector<8x128xf32>
    %cst_57 = arith.constant 5.000000e-01 : f32
    %276 = vector.broadcast %cst_57 : f32 to vector<8x128xf32>
    %277 = arith.mulf %276, %275 : vector<8x128xf32>
    %cst_58 = arith.constant 5.000000e-01 : f32
    %278 = vector.broadcast %cst_58 : f32 to vector<8x128xf32>
    %279 = arith.addf %277, %278 : vector<8x128xf32>
    %280 = arith.select %16, %275, %279 : vector<8x128xi1>, vector<8x128xf32>
    %281 = vector.extract_strided_slice %280 {offsets = [0, 0], sizes = [8, 32], strides = [1, 1]} : vector<8x128xf32> to vector<8x32xf32>
    %282 = vector.extract_strided_slice %280 {offsets = [0, 32], sizes = [8, 32], strides = [1, 1]} : vector<8x128xf32> to vector<8x32xf32>
    %283 = vector.extract_strided_slice %280 {offsets = [0, 64], sizes = [8, 32], strides = [1, 1]} : vector<8x128xf32> to vector<8x32xf32>
    %284 = vector.extract_strided_slice %280 {offsets = [0, 96], sizes = [8, 32], strides = [1, 1]} : vector<8x128xf32> to vector<8x32xf32>
    %285 = arith.mulf %282, %245 : vector<8x32xf32>
    %286 = arith.mulf %281, %283 : vector<8x32xf32>
    %287 = arith.addf %285, %286 : vector<8x32xf32>
    %288 = math.tanh %287 : vector<8x32xf32>
    %289 = arith.mulf %284, %288 : vector<8x32xf32>
    %c7_i32 = arith.constant 7 : i32
    %c8_i32_59 = arith.constant 8 : i32
    %290 = arith.muli %c7_i32, %c8_i32_59 : i32
    %291 = tpu.assume_multiple %290, 8 : i32
    %292 = tpu.concatenate %273, %289 in 1 : vector<8x32xf32>, vector<8x32xf32> -> vector<8x64xf32>
    %cst_60 = arith.constant dense<0.000000e+00> : vector<8x256xf32>
    %293 = tpu.matmul %292, %7, %cst_60 {dimension_numbers = #tpu.dot_dimension_numbers<[1], [0], [0], [1], [0, 0, 1, 1], [], []>} : vector<8x64xf32>, vector<64x256xf32>, vector<8x256xf32> -> vector<8x256xf32>
    %294 = vector.extract_strided_slice %293 {offsets = [0, 0], sizes = [8, 128], strides = [1, 1]} : vector<8x256xf32> to vector<8x128xf32>
    %295 = arith.index_cast %291 : i32 to index
    %c0_61 = arith.constant 0 : index
    %296 = vector.load %arg8[%295, %c0_61] : memref<64x128xf32, #tpu.memory_space<vmem>>, vector<8x128xf32>
    %297 = arith.addf %294, %296 : vector<8x128xf32>
    %298 = vector.extract_strided_slice %293 {offsets = [0, 128], sizes = [8, 128], strides = [1, 1]} : vector<8x256xf32> to vector<8x128xf32>
    %299 = arith.addf %298, %10 : vector<8x128xf32>
    %300 = arith.mulf %297, %19 : vector<8x128xf32>
    %301 = math.tanh %300 : vector<8x128xf32>
    %cst_62 = arith.constant 5.000000e-01 : f32
    %302 = vector.broadcast %cst_62 : f32 to vector<8x128xf32>
    %303 = arith.mulf %302, %301 : vector<8x128xf32>
    %cst_63 = arith.constant 5.000000e-01 : f32
    %304 = vector.broadcast %cst_63 : f32 to vector<8x128xf32>
    %305 = arith.addf %303, %304 : vector<8x128xf32>
    %306 = arith.select %16, %301, %305 : vector<8x128xi1>, vector<8x128xf32>
    %307 = vector.extract_strided_slice %306 {offsets = [0, 0], sizes = [8, 32], strides = [1, 1]} : vector<8x128xf32> to vector<8x32xf32>
    %308 = vector.extract_strided_slice %306 {offsets = [0, 32], sizes = [8, 32], strides = [1, 1]} : vector<8x128xf32> to vector<8x32xf32>
    %309 = vector.extract_strided_slice %306 {offsets = [0, 64], sizes = [8, 32], strides = [1, 1]} : vector<8x128xf32> to vector<8x32xf32>
    %310 = vector.extract_strided_slice %306 {offsets = [0, 96], sizes = [8, 32], strides = [1, 1]} : vector<8x128xf32> to vector<8x32xf32>
    %311 = arith.mulf %308, %271 : vector<8x32xf32>
    %312 = arith.mulf %307, %309 : vector<8x32xf32>
    %313 = arith.addf %311, %312 : vector<8x32xf32>
    %314 = math.tanh %313 : vector<8x32xf32>
    %315 = arith.mulf %310, %314 : vector<8x32xf32>
    %316 = arith.mulf %299, %19 : vector<8x128xf32>
    %317 = math.tanh %316 : vector<8x128xf32>
    %cst_64 = arith.constant 5.000000e-01 : f32
    %318 = vector.broadcast %cst_64 : f32 to vector<8x128xf32>
    %319 = arith.mulf %318, %317 : vector<8x128xf32>
    %cst_65 = arith.constant 5.000000e-01 : f32
    %320 = vector.broadcast %cst_65 : f32 to vector<8x128xf32>
    %321 = arith.addf %319, %320 : vector<8x128xf32>
    %322 = arith.select %16, %317, %321 : vector<8x128xi1>, vector<8x128xf32>
    %323 = vector.extract_strided_slice %322 {offsets = [0, 0], sizes = [8, 32], strides = [1, 1]} : vector<8x128xf32> to vector<8x32xf32>
    %324 = vector.extract_strided_slice %322 {offsets = [0, 32], sizes = [8, 32], strides = [1, 1]} : vector<8x128xf32> to vector<8x32xf32>
    %325 = vector.extract_strided_slice %322 {offsets = [0, 64], sizes = [8, 32], strides = [1, 1]} : vector<8x128xf32> to vector<8x32xf32>
    %326 = vector.extract_strided_slice %322 {offsets = [0, 96], sizes = [8, 32], strides = [1, 1]} : vector<8x128xf32> to vector<8x32xf32>
    %327 = arith.mulf %324, %287 : vector<8x32xf32>
    %328 = arith.mulf %323, %325 : vector<8x32xf32>
    %329 = arith.addf %327, %328 : vector<8x32xf32>
    %330 = math.tanh %329 : vector<8x32xf32>
    %331 = arith.mulf %326, %330 : vector<8x32xf32>
    %c7_i32_66 = arith.constant 7 : i32
    %332 = tpu.concatenate %315, %331 in 1 : vector<8x32xf32>, vector<8x32xf32> -> vector<8x64xf32>
    %333 = vector.extract_strided_slice %7 {offsets = [0, 128], sizes = [64, 128], strides = [1, 1]} : vector<64x256xf32> to vector<64x128xf32>
    %cst_67 = arith.constant dense<0.000000e+00> : vector<8x128xf32>
    %334 = tpu.matmul %332, %333, %cst_67 {dimension_numbers = #tpu.dot_dimension_numbers<[1], [0], [0], [1], [0, 0, 1, 1], [], []>} : vector<8x64xf32>, vector<64x128xf32>, vector<8x128xf32> -> vector<8x128xf32>
    %335 = arith.addf %334, %10 : vector<8x128xf32>
    %336 = arith.mulf %335, %19 : vector<8x128xf32>
    %337 = math.tanh %336 : vector<8x128xf32>
    %cst_68 = arith.constant 5.000000e-01 : f32
    %338 = vector.broadcast %cst_68 : f32 to vector<8x128xf32>
    %339 = arith.mulf %338, %337 : vector<8x128xf32>
    %cst_69 = arith.constant 5.000000e-01 : f32
    %340 = vector.broadcast %cst_69 : f32 to vector<8x128xf32>
    %341 = arith.addf %339, %340 : vector<8x128xf32>
    %342 = arith.select %16, %337, %341 : vector<8x128xi1>, vector<8x128xf32>
    %343 = vector.extract_strided_slice %342 {offsets = [0, 0], sizes = [8, 32], strides = [1, 1]} : vector<8x128xf32> to vector<8x32xf32>
    %344 = vector.extract_strided_slice %342 {offsets = [0, 32], sizes = [8, 32], strides = [1, 1]} : vector<8x128xf32> to vector<8x32xf32>
    %345 = vector.extract_strided_slice %342 {offsets = [0, 64], sizes = [8, 32], strides = [1, 1]} : vector<8x128xf32> to vector<8x32xf32>
    %346 = vector.extract_strided_slice %342 {offsets = [0, 96], sizes = [8, 32], strides = [1, 1]} : vector<8x128xf32> to vector<8x32xf32>
    %347 = arith.mulf %344, %329 : vector<8x32xf32>
    %348 = arith.mulf %343, %345 : vector<8x32xf32>
    %349 = arith.addf %347, %348 : vector<8x32xf32>
    %350 = math.tanh %349 : vector<8x32xf32>
    %351 = arith.mulf %346, %350 : vector<8x32xf32>
    %c0_70 = arith.constant 0 : index
    %c0_71 = arith.constant 0 : index
    %352 = vector.load %arg5[%c0_70, %c0_71] : memref<32x1xf32, #tpu.memory_space<vmem>>, vector<32x1xf32>
    %cst_72 = arith.constant dense<0.000000e+00> : vector<8x1xf32>
    %353 = tpu.matmul %351, %352, %cst_72 {dimension_numbers = #tpu.dot_dimension_numbers<[1], [0], [0], [1], [0, 0, 1, 1], [], []>} : vector<8x32xf32>, vector<32x1xf32>, vector<8x1xf32> -> vector<8x1xf32>
    %c0_73 = arith.constant 0 : index
    %c0_74 = arith.constant 0 : index
    %354 = vector.load %arg6[%c0_73, %c0_74] : memref<1x1xf32, #tpu.memory_space<vmem>>, vector<1x1xf32>
    %355 = vector.broadcast %354 : vector<1x1xf32> to vector<8x1xf32>
    %356 = arith.addf %353, %355 : vector<8x1xf32>
    %c0_75 = arith.constant 0 : index
    %c0_76 = arith.constant 0 : index
    %357 = vector.load %arg7[%c0_75, %c0_76] : memref<8x1xf32, #tpu.memory_space<vmem>>, vector<8x1xf32>
    tpu.vector_store %arg7[%c0_75, %c0_76], %356 {strides = array<i32>} : memref<8x1xf32, #tpu.memory_space<vmem>>, vector<8x1xf32>,
    return
  }
}

</mosaic_0001>

<llo_original>
// kernel: stock_rnn_forward.1
$region0: #{stock_rnn_forward.1}
  #allocation0 [shape = 'u32[]', space=smem, size = 0x4, offset = 0x4, fixed_abs, tag = 'smem constant byte address 0x4 - core index']
  #allocation1 [shape = 'u32[72,128]{1,0:T(1,128)}', space=vmem, size = 0x9000, scoped, tag = 'internal scratch']
  #allocation2 [shape = 'f32[64,128]{1,0:T(8,128)}', space=vmem, size = 0x8000, scoped, tag = 'scratch operand']
  #allocation3 [shape = 'f32[1,1]{1,0:T(1,128)S(1)}', space=vmem, size = 0x200, scoped, tag = 'scoped memory for stock_rnn_forward.1']
  %s0 = inlined_call_operand.vmem [shape: f32[64,4], index: 0, kind: input, shape index: {}]
  %s1 = inlined_call_operand.vmem [shape: f32[4,128], index: 1, kind: input, shape index: {}]
  %s2 = inlined_call_operand.vmem [shape: f32[1,128], index: 2, kind: input, shape index: {}]
  %s3 = inlined_call_operand.hbm [shape: f32[64,256], index: 3, kind: input, shape index: {}]
  %s4 = inlined_call_operand.vmem [shape: f32[1,128], index: 4, kind: input, shape index: {}]
  %s5 = inlined_call_operand.vmem [shape: f32[32,1], index: 5, kind: input, shape index: {}]
  %s6 = inlined_call_operand.<no memory space> [shape: f32[1,1], index: 6, kind: input, shape index: {}]
  %s7 = inlined_call_operand.vmem [shape: f32[8,1], index: 7, kind: output, shape index: {}]
  %s8 = sld [smem:[#allocation0]]
  $region42: #{stock_rnn_forward.1} parent=0
    _
  %s10 = ssub.s32 1, %s8
  %s11 = scalar_select 0, %s10, %s8
  %v12 = vstv %s6
  %13 = vst [vmem:[#allocation3] sm:$0x1] %v12
  $region1: #{stock_rnn_forward.1} parent=0
    #allocation4 [shape = 'u8[65536]{0}', space=vmem, size = 0x10000, scoped, tag = 'input window, operand 3, single buffered']
    #allocation5 [shape = 's32[1]{0}', space=sflag, size = 0x4, scoped, tag = 'scoped memory for stock_rnn_forward.1']
    %14 = vsyncpa [#allocation5], 0
    // Predicated region
    $region2: #{stock_rnn_forward.1} parent=1 // pred_check
      _
    $region3: #{stock_rnn_forward.1} parent=1 // pred_check_branch
      %16 = sbr.rel (0) target = $region5
    $region4: #{stock_rnn_forward.1} parent=1 // pred_region
      _
    $region5: #{stock_rnn_forward.1} parent=1 // pred_fallthru
      _
    // Predicated region
    $region6: #{stock_rnn_forward.1} parent=1 // pred_check
      _
    $region7: #{stock_rnn_forward.1} parent=1 // pred_check_branch
      %18 = sbr.rel (0) target = $region9
    $region8: #{stock_rnn_forward.1} parent=1 // pred_region
      _
    $region9: #{stock_rnn_forward.1} parent=1 // pred_fallthru
      _
    // Predicated region
    $region10: #{stock_rnn_forward.1} parent=1 // pred_check
      _
    $region11: #{stock_rnn_forward.1} parent=1 // pred_check_branch
      %20 = sbr.rel (0) target = $region13
    $region12: #{stock_rnn_forward.1} parent=1 // pred_region
      _
    $region13: #{stock_rnn_forward.1} parent=1 // pred_fallthru
      _
    // Predicated region
    $region14: #{stock_rnn_forward.1} parent=1 // pred_check
      _
    $region15: #{stock_rnn_forward.1} parent=1 // pred_check_branch
      %22 = sbr.rel (0) target = $region17
    $region16: #{stock_rnn_forward.1} parent=1 // pred_region
      %24 = vsyncadd [#allocation5], 0
      %s25 = sshll.u32 %s3, 4
      %s26 = int_to_ptr.hbm [resolvable:$true] %s25
      %s27 = sshll.u32 [#allocation4], 4
      %s28 = int_to_ptr.vmem [resolvable:$true] %s27
      %33 = dma.hbm_to_vmem [thread:$0]  %s26, 2048, %s28, [#allocation5], 256, 256, 16
    $region17: #{stock_rnn_forward.1} parent=1 // pred_fallthru
      _
    // Predicated region
    $region18: #{stock_rnn_forward.1} parent=1 // pred_check
      _
    $region19: #{stock_rnn_forward.1} parent=1 // pred_check_branch
      %35 = sbr.rel (0) target = $region21
    $region20: #{stock_rnn_forward.1} parent=1 // pred_region
      _
    $region21: #{stock_rnn_forward.1} parent=1 // pred_fallthru
      _
    // Predicated region
    $region22: #{stock_rnn_forward.1} parent=1 // pred_check
      _
    $region23: #{stock_rnn_forward.1} parent=1 // pred_check_branch
      %37 = sbr.rel (0) target = $region25
    $region24: #{stock_rnn_forward.1} parent=1 // pred_region
      _
    $region25: #{stock_rnn_forward.1} parent=1 // pred_fallthru
      _
    // Predicated region
    $region26: #{stock_rnn_forward.1} parent=1 // pred_check
      _
    $region27: #{stock_rnn_forward.1} parent=1 // pred_check_branch
      %39 = sbr.rel (0) target = $region29
    $region28: #{stock_rnn_forward.1} parent=1 // pred_region
      _
    $region29: #{stock_rnn_forward.1} parent=1 // pred_fallthru
      _
    // Predicated region
    $region30: #{stock_rnn_forward.1} parent=1 // pred_check
      _
    $region31: #{stock_rnn_forward.1} parent=1 // pred_check_branch
      %41 = sbr.rel (0) target = $region33
    $region32: #{stock_rnn_forward.1} parent=1 // pred_region
      %43 = dma.done [#allocation5], 2048
    $region33: #{stock_rnn_forward.1} parent=1 // pred_fallthru
      _
    %v44 = vld [vmem:[%s0] sm:$0xff]
    %v45 = vld [vmem:[%s0 + $0x8] sm:$0xff]
    %v46 = vld [vmem:[%s0 + $0x10] sm:$0xff]
    %v47 = vld [vmem:[%s0 + $0x18] sm:$0xff]
    %v48 = vld [vmem:[%s0 + $0x20] sm:$0xff]
    %v49 = vld [vmem:[%s0 + $0x28] sm:$0xff]
    %v50 = vld [vmem:[%s0 + $0x30] sm:$0xff]
    %v51 = vld [vmem:[%s0 + $0x38] sm:$0xff]
    %v52 = vld [vmem:[%s1] sm:$0xf]
    %v53 = vld [vmem:[%s2] sm:$0x1]
    %v55 = vperm.slane %v53, 0
    %vm57 = vcmask 31744
    %v59 = vsel %vm57, %v44, 0
    %v62 = vsel %vm57, %v45, 0
    %v65 = vsel %vm57, %v46, 0
    %v68 = vsel %vm57, %v47, 0
    %v71 = vsel %vm57, %v48, 0
    %v74 = vsel %vm57, %v49, 0
    %v77 = vsel %vm57, %v50, 0
    %v80 = vsel %vm57, %v51, 0
    %vm82 = vcmask 1043456
    %v84 = vsel %vm82, %v52, 0
    %86 = vmatpush.msra.mxu0 0.0
    %87 = vmatpush.msra.mxu0 0.0
    %88 = vmatpush.msra.mxu0 0.0
    %89 = vmatpush.msra.mxu0 0.0
    %90 = vmatpush.msra.mxu0 0.0
    %91 = vmatpush.msra.mxu0 0.0
    %92 = vmatpush.msra.mxu0 0.0
    %93 = vmatpush.msra.mxu0 0.0
    %94 = vmatpush.msra.mxu0 0.0
    %95 = vmatpush.msra.mxu0 0.0
    %96 = vmatpush.msra.mxu0 0.0
    %97 = vmatpush.msra.mxu0 0.0
    %98 = vmatpush.msra.mxu0 0.0
    %99 = vmatpush.msra.mxu0 0.0
    %100 = vmatpush.msra.mxu0 0.0
    %101 = vmatpush.msra.mxu0 %v84
    %102 = vmatmul.f32.gmra.mxu0 %v59
    %v103 = vpop.f32.mrf.mxu0
    %v104 = vadd.f32 %v55, %v103
    %105 = vmatmul.f32.gmra.mxu0 %v62
    %v106 = vpop.f32.mrf.mxu0
    %v107 = vadd.f32 %v55, %v106
    %108 = vmatmul.f32.gmra.mxu0 %v65
    %v109 = vpop.f32.mrf.mxu0
    %v110 = vadd.f32 %v55, %v109
    %111 = vmatmul.f32.gmra.mxu0 %v68
    %v112 = vpop.f32.mrf.mxu0
    %v113 = vadd.f32 %v55, %v112
    %114 = vmatmul.f32.gmra.mxu0 %v71
    %v115 = vpop.f32.mrf.mxu0
    %v116 = vadd.f32 %v55, %v115
    %117 = vmatmul.f32.gmra.mxu0 %v74
    %v118 = vpop.f32.mrf.mxu0
    %v119 = vadd.f32 %v55, %v118
    %120 = vmatmul.f32.gmra.mxu0 %v77
    %v121 = vpop.f32.mrf.mxu0
    %v122 = vadd.f32 %v55, %v121
    %123 = vmatmul.f32.gmra.mxu0 %v80
    %v124 = vpop.f32.mrf.mxu0
    %v125 = vadd.f32 %v55, %v124
    %126 = vdwg.mxu0
    %127 = vst [vmem:[#allocation2] sm:$0xff] %v104
    %128 = vst [vmem:[#allocation2 + $0x8] sm:$0xff] %v107
    %129 = vst [vmem:[#allocation2 + $0x10] sm:$0xff] %v110
    %130 = vst [vmem:[#allocation2 + $0x18] sm:$0xff] %v113
    %131 = vst [vmem:[#allocation2 + $0x20] sm:$0xff] %v116
    %132 = vst [vmem:[#allocation2 + $0x28] sm:$0xff] %v119
    %133 = vst [vmem:[#allocation2 + $0x30] sm:$0xff] %v122
    %134 = vst [vmem:[#allocation2 + $0x38] sm:$0xff] %v125
    %v135 = vld [vmem:[#allocation4] sm:$0xff]
    %v136 = vld [vmem:[#allocation4 + $0x8] sm:$0xff]
    %v137 = vld [vmem:[#allocation4 + $0x10] sm:$0xff]
    %v138 = vld [vmem:[#allocation4 + $0x18] sm:$0xff]
    %v139 = vld [vmem:[#allocation4 + $0x20] sm:$0xff]
    %v140 = vld [vmem:[#allocation4 + $0x28] sm:$0xff]
    %v141 = vld [vmem:[#allocation4 + $0x30] sm:$0xff]
    %v142 = vld [vmem:[#allocation4 + $0x38] sm:$0xff]
    %v143 = vld [vmem:[#allocation4 + $0x40] sm:$0xff]
    %v144 = vld [vmem:[#allocation4 + $0x48] sm:$0xff]
    %v145 = vld [vmem:[#allocation4 + $0x50] sm:$0xff]
    %v146 = vld [vmem:[#allocation4 + $0x58] sm:$0xff]
    %v147 = vld [vmem:[#allocation4 + $0x60] sm:$0xff]
    %v148 = vld [vmem:[#allocation4 + $0x68] sm:$0xff]
    %v149 = vld [vmem:[#allocation4 + $0x70] sm:$0xff]
    %v150 = vld [vmem:[#allocation4 + $0x78] sm:$0xff]
    %v151 = vld [vmem:[%s4] sm:$0x1]
    %v153 = vperm.slane %v151, 0
    %v155 = vlaneseq
    %v156 = vand.u32 %v155, 127
    %vm157 = vcmp.ge.s32.totalorder %v156, 64
    %vm158 = vcmp.lt.s32.totalorder %v156, 96
    %vm159 = vmand %vm157, %vm158
    %v160 = vsel %vm159, 1.0, 0.5
    %v161 = vld [vmem:[#allocation2] sm:$0xff]
    %v162 = vmul.f32 %v161, %v160
    %v163 = vtanh.pop %v162
    %v164 = vmul.f32 %v163, 0.5
    %v165 = vadd.f32 %v164, 0.5
    %v166 = vsel %vm159, %v163, %v165
    %v167 = vmul.f32 %v166, 0.0
    %169 = vrot.lane.b32.xlu0 %v166, 64
    %v170 = vpop.permute.xlu0 %169
    %v172 = vmul.f32 %v166, %v170
    %174 = vrot.lane.b32.xlu0 %v172, 32
    %v175 = vpop.permute.xlu0 %174
    %v177 = vadd.f32 %v167, %v175
    %v178 = vtanh.pop %v177
    %180 = vrot.lane.b32.xlu0 %v178, 64
    %v181 = vpop.permute.xlu0 %180
    %v183 = vmul.f32 %v166, %v181
    %185 = vrot.lane.b32.xlu0 %v183, 32
    %v186 = vpop.permute.xlu0 %185
    %vm188 = vcmask 261120
    %v189 = vsel %vm188, %v186, 0.0
    %vm190 = vcmask 523264
    %v192 = vsel %vm190, %v189, 0
    %194 = vmatpush.msra.mxu0 0.0
    %195 = vmatpush.msra.mxu0 0.0
    %196 = vmatpush.msra.mxu0 0.0
    %197 = vmatpush.msra.mxu0 0.0
    %198 = vmatpush.msra.mxu0 0.0
    %199 = vmatpush.msra.mxu0 0.0
    %200 = vmatpush.msra.mxu0 0.0
    %201 = vmatpush.msra.mxu0 0.0
    %202 = vmatpush.msra.mxu0 %v149
    %203 = vmatpush.msra.mxu0 %v147
    %204 = vmatpush.msra.mxu0 %v145
    %205 = vmatpush.msra.mxu0 %v143
    %206 = vmatpush.msra.mxu0 %v141
    %207 = vmatpush.msra.mxu0 %v139
    %208 = vmatpush.msra.mxu0 %v137
    %209 = vmatpush.msra.mxu0 %v135
    %210 = vmatmul.f32.gmra.mxu0 %v192
    %v211 = vpop.f32.mrf.mxu0
    %v212 = vadd.f32 0.0, %v211
    %213 = vdwg.mxu0
    %214 = vmatpush.msra.mxu0 0.0
    %215 = vmatpush.msra.mxu0 0.0
    %216 = vmatpush.msra.mxu0 0.0
    %217 = vmatpush.msra.mxu0 0.0
    %218 = vmatpush.msra.mxu0 0.0
    %219 = vmatpush.msra.mxu0 0.0
    %220 = vmatpush.msra.mxu0 0.0
    %221 = vmatpush.msra.mxu0 0.0
    %222 = vmatpush.msra.mxu0 %v150
    %223 = vmatpush.msra.mxu0 %v148
    %224 = vmatpush.msra.mxu0 %v146
    %225 = vmatpush.msra.mxu0 %v144
    %226 = vmatpush.msra.mxu0 %v142
    %227 = vmatpush.msra.mxu0 %v140
    %228 = vmatpush.msra.mxu0 %v138
    %229 = vmatpush.msra.mxu0 %v136
    %230 = vmatmul.f32.gmra.mxu0 %v192
    %v231 = vpop.f32.mrf.mxu0
    %v232 = vadd.f32 0.0, %v231
    %233 = vdwg.mxu0
    %s234 = scalar_lea.vmem [#allocation2], 8
    %v235 = vld [vmem:[%s234] sm:$0xff]
    %v236 = vadd.f32 %v212, %v235
    %v237 = vadd.f32 %v232, %v153
    %v238 = vmul.f32 %v236, %v160
    %v239 = vtanh.pop %v238
    %v240 = vmul.f32 %v239, 0.5
    %v241 = vadd.f32 %v240, 0.5
    %v242 = vsel %vm159, %v239, %v241
    %v243 = vmul.f32 %v242, %v177
    %245 = vrot.lane.b32.xlu0 %v242, 64
    %v246 = vpop.permute.xlu0 %245
    %v248 = vmul.f32 %v242, %v246
    %250 = vrot.lane.b32.xlu0 %v248, 32
    %v251 = vpop.permute.xlu0 %250
    %v253 = vadd.f32 %v243, %v251
    %v254 = vtanh.pop %v253
    %256 = vrot.lane.b32.xlu0 %v254, 64
    %v257 = vpop.permute.xlu0 %256
    %v259 = vmul.f32 %v242, %v257
    %v260 = vmul.f32 %v237, %v160
    %v261 = vtanh.pop %v260
    %v262 = vmul.f32 %v261, 0.5
    %v263 = vadd.f32 %v262, 0.5
    %v264 = vsel %vm159, %v261, %v263
    %v265 = vmul.f32 %v264, 0.0
    %267 = vrot.lane.b32.xlu0 %v264, 64
    %v268 = vpop.permute.xlu0 %267
    %v270 = vmul.f32 %v264, %v268
    %272 = vrot.lane.b32.xlu0 %v270, 32
    %v273 = vpop.permute.xlu0 %272
    %v275 = vadd.f32 %v265, %v273
    %v276 = vtanh.pop %v275
    %278 = vrot.lane.b32.xlu0 %v276, 64
    %v279 = vpop.permute.xlu0 %278
    %v281 = vmul.f32 %v264, %v279
    %283 = vrot.lane.b32.xlu0 %v259, 32
    %v284 = vpop.permute.xlu0 %283
    %287 = vrot.lane.b32.xlu0 %v281, 64
    %v288 = vpop.permute.xlu0 %287
    %v290 = vsel %vm188, %v284, %v288
    %v292 = vsel %vm190, %v290, 0
    %294 = vmatpush.msra.mxu0 0.0
    %295 = vmatpush.msra.mxu0 0.0
    %296 = vmatpush.msra.mxu0 0.0
    %297 = vmatpush.msra.mxu0 0.0
    %298 = vmatpush.msra.mxu0 0.0
    %299 = vmatpush.msra.mxu0 0.0
    %300 = vmatpush.msra.mxu0 0.0
    %301 = vmatpush.msra.mxu0 0.0
    %302 = vmatpush.msra.mxu0 %v149
    %303 = vmatpush.msra.mxu0 %v147
    %304 = vmatpush.msra.mxu0 %v145
    %305 = vmatpush.msra.mxu0 %v143
    %306 = vmatpush.msra.mxu0 %v141
    %307 = vmatpush.msra.mxu0 %v139
    %308 = vmatpush.msra.mxu0 %v137
    %309 = vmatpush.msra.mxu0 %v135
    %310 = vmatmul.f32.gmra.mxu0 %v292
    %v311 = vpop.f32.mrf.mxu0
    %v312 = vadd.f32 0.0, %v311
    %313 = vdwg.mxu0
    %314 = vmatpush.msra.mxu0 0.0
    %315 = vmatpush.msra.mxu0 0.0
    %316 = vmatpush.msra.mxu0 0.0
    %317 = vmatpush.msra.mxu0 0.0
    %318 = vmatpush.msra.mxu0 0.0
    %319 = vmatpush.msra.mxu0 0.0
    %320 = vmatpush.msra.mxu0 0.0
    %321 = vmatpush.msra.mxu0 0.0
    %322 = vmatpush.msra.mxu0 %v150
    %323 = vmatpush.msra.mxu0 %v148
    %324 = vmatpush.msra.mxu0 %v146
    %325 = vmatpush.msra.mxu0 %v144
    %326 = vmatpush.msra.mxu0 %v142
    %327 = vmatpush.msra.mxu0 %v140
    %328 = vmatpush.msra.mxu0 %v138
    %329 = vmatpush.msra.mxu0 %v136
    %330 = vmatmul.f32.gmra.mxu0 %v292
    %v331 = vpop.f32.mrf.mxu0
    %v332 = vadd.f32 0.0, %v331
    %333 = vdwg.mxu0
    %s334 = scalar_lea.vmem [#allocation2], 16
    %v335 = vld [vmem:[%s334] sm:$0xff]
    %v336 = vadd.f32 %v312, %v335
    %v337 = vadd.f32 %v332, %v153
    %v338 = vmul.f32 %v336, %v160
    %v339 = vtanh.pop %v338
    %v340 = vmul.f32 %v339, 0.5
    %v341 = vadd.f32 %v340, 0.5
    %v342 = vsel %vm159, %v339, %v341
    %v343 = vmul.f32 %v342, %v253
    %345 = vrot.lane.b32.xlu0 %v342, 64
    %v346 = vpop.permute.xlu0 %345
    %v348 = vmul.f32 %v342, %v346
    %350 = vrot.lane.b32.xlu0 %v348, 32
    %v351 = vpop.permute.xlu0 %350
    %v353 = vadd.f32 %v343, %v351
    %v354 = vtanh.pop %v353
    %356 = vrot.lane.b32.xlu0 %v354, 64
    %v357 = vpop.permute.xlu0 %356
    %v359 = vmul.f32 %v342, %v357
    %v360 = vmul.f32 %v337, %v160
    %v361 = vtanh.pop %v360
    %v362 = vmul.f32 %v361, 0.5
    %v363 = vadd.f32 %v362, 0.5
    %v364 = vsel %vm159, %v361, %v363
    %v365 = vmul.f32 %v364, %v275
    %367 = vrot.lane.b32.xlu0 %v364, 64
    %v368 = vpop.permute.xlu0 %367
    %v370 = vmul.f32 %v364, %v368
    %372 = vrot.lane.b32.xlu0 %v370, 32
    %v373 = vpop.permute.xlu0 %372
    %v375 = vadd.f32 %v365, %v373
    %v376 = vtanh.pop %v375
    %378 = vrot.lane.b32.xlu0 %v376, 64
    %v379 = vpop.permute.xlu0 %378
    %v381 = vmul.f32 %v364, %v379
    %383 = vrot.lane.b32.xlu0 %v359, 32
    %v384 = vpop.permute.xlu0 %383
    %387 = vrot.lane.b32.xlu0 %v381, 64
    %v388 = vpop.permute.xlu0 %387
    %v390 = vsel %vm188, %v384, %v388
    %v392 = vsel %vm190, %v390, 0
    %394 = vmatpush.msra.mxu0 0.0
    %395 = vmatpush.msra.mxu0 0.0
    %396 = vmatpush.msra.mxu0 0.0
    %397 = vmatpush.msra.mxu0 0.0
    %398 = vmatpush.msra.mxu0 0.0
    %399 = vmatpush.msra.mxu0 0.0
    %400 = vmatpush.msra.mxu0 0.0
    %401 = vmatpush.msra.mxu0 0.0
    %402 = vmatpush.msra.mxu0 %v149
    %403 = vmatpush.msra.mxu0 %v147
    %404 = vmatpush.msra.mxu0 %v145
    %405 = vmatpush.msra.mxu0 %v143
    %406 = vmatpush.msra.mxu0 %v141
    %407 = vmatpush.msra.mxu0 %v139
    %408 = vmatpush.msra.mxu0 %v137
    %409 = vmatpush.msra.mxu0 %v135
    %410 = vmatmul.f32.gmra.mxu0 %v392
    %v411 = vpop.f32.mrf.mxu0
    %v412 = vadd.f32 0.0, %v411
    %413 = vdwg.mxu0
    %414 = vmatpush.msra.mxu0 0.0
    %415 = vmatpush.msra.mxu0 0.0
    %416 = vmatpush.msra.mxu0 0.0
    %417 = vmatpush.msra.mxu0 0.0
    %418 = vmatpush.msra.mxu0 0.0
    %419 = vmatpush.msra.mxu0 0.0
    %420 = vmatpush.msra.mxu0 0.0
    %421 = vmatpush.msra.mxu0 0.0
    %422 = vmatpush.msra.mxu0 %v150
    %423 = vmatpush.msra.mxu0 %v148
    %424 = vmatpush.msra.mxu0 %v146
    %425 = vmatpush.msra.mxu0 %v144
    %426 = vmatpush.msra.mxu0 %v142
    %427 = vmatpush.msra.mxu0 %v140
    %428 = vmatpush.msra.mxu0 %v138
    %429 = vmatpush.msra.mxu0 %v136
    %430 = vmatmul.f32.gmra.mxu0 %v392
    %v431 = vpop.f32.mrf.mxu0
    %v432 = vadd.f32 0.0, %v431
    %433 = vdwg.mxu0
    %s434 = scalar_lea.vmem [#allocation2], 24
    %v435 = vld [vmem:[%s434] sm:$0xff]
    %v436 = vadd.f32 %v412, %v435
    %v437 = vadd.f32 %v432, %v153
    %v438 = vmul.f32 %v436, %v160
    %v439 = vtanh.pop %v438
    %v440 = vmul.f32 %v439, 0.5
    %v441 = vadd.f32 %v440, 0.5
    %v442 = vsel %vm159, %v439, %v441
    %v443 = vmul.f32 %v442, %v353
    %445 = vrot.lane.b32.xlu0 %v442, 64
    %v446 = vpop.permute.xlu0 %445
    %v448 = vmul.f32 %v442, %v446
    %450 = vrot.lane.b32.xlu0 %v448, 32
    %v451 = vpop.permute.xlu0 %450
    %v453 = vadd.f32 %v443, %v451
    %v454 = vtanh.pop %v453
    %456 = vrot.lane.b32.xlu0 %v454, 64
    %v457 = vpop.permute.xlu0 %456
    %v459 = vmul.f32 %v442, %v457
    %v460 = vmul.f32 %v437, %v160
    %v461 = vtanh.pop %v460
    %v462 = vmul.f32 %v461, 0.5
    %v463 = vadd.f32 %v462, 0.5
    %v464 = vsel %vm159, %v461, %v463
    %v465 = vmul.f32 %v464, %v375
    %467 = vrot.lane.b32.xlu0 %v464, 64
    %v468 = vpop.permute.xlu0 %467
    %v470 = vmul.f32 %v464, %v468
    %472 = vrot.lane.b32.xlu0 %v470, 32
    %v473 = vpop.permute.xlu0 %472
    %v475 = vadd.f32 %v465, %v473
    %v476 = vtanh.pop %v475
    %478 = vrot.lane.b32.xlu0 %v476, 64
    %v479 = vpop.permute.xlu0 %478
    %v481 = vmul.f32 %v464, %v479
    %483 = vrot.lane.b32.xlu0 %v459, 32
    %v484 = vpop.permute.xlu0 %483
    %487 = vrot.lane.b32.xlu0 %v481, 64
    %v488 = vpop.permute.xlu0 %487
    %v490 = vsel %vm188, %v484, %v488
    %v492 = vsel %vm190, %v490, 0
    %494 = vmatpush.msra.mxu0 0.0
    %495 = vmatpush.msra.mxu0 0.0
    %496 = vmatpush.msra.mxu0 0.0
    %497 = vmatpush.msra.mxu0 0.0
    %498 = vmatpush.msra.mxu0 0.0
    %499 = vmatpush.msra.mxu0 0.0
    %500 = vmatpush.msra.mxu0 0.0
    %501 = vmatpush.msra.mxu0 0.0
    %502 = vmatpush.msra.mxu0 %v149
    %503 = vmatpush.msra.mxu0 %v147
    %504 = vmatpush.msra.mxu0 %v145
    %505 = vmatpush.msra.mxu0 %v143
    %506 = vmatpush.msra.mxu0 %v141
    %507 = vmatpush.msra.mxu0 %v139
    %508 = vmatpush.msra.mxu0 %v137
    %509 = vmatpush.msra.mxu0 %v135
    %510 = vmatmul.f32.gmra.mxu0 %v492
    %v511 = vpop.f32.mrf.mxu0
    %v512 = vadd.f32 0.0, %v511
    %513 = vdwg.mxu0
    %514 = vmatpush.msra.mxu0 0.0
    %515 = vmatpush.msra.mxu0 0.0
    %516 = vmatpush.msra.mxu0 0.0
    %517 = vmatpush.msra.mxu0 0.0
    %518 = vmatpush.msra.mxu0 0.0
    %519 = vmatpush.msra.mxu0 0.0
    %520 = vmatpush.msra.mxu0 0.0
    %521 = vmatpush.msra.mxu0 0.0
    %522 = vmatpush.msra.mxu0 %v150
    %523 = vmatpush.msra.mxu0 %v148
    %524 = vmatpush.msra.mxu0 %v146
    %525 = vmatpush.msra.mxu0 %v144
    %526 = vmatpush.msra.mxu0 %v142
    %527 = vmatpush.msra.mxu0 %v140
    %528 = vmatpush.msra.mxu0 %v138
    %529 = vmatpush.msra.mxu0 %v136
    %530 = vmatmul.f32.gmra.mxu0 %v492
    %v531 = vpop.f32.mrf.mxu0
    %v532 = vadd.f32 0.0, %v531
    %533 = vdwg.mxu0
    %s534 = scalar_lea.vmem [#allocation2], 32
    %v535 = vld [vmem:[%s534] sm:$0xff]
    %v536 = vadd.f32 %v512, %v535
    %v537 = vadd.f32 %v532, %v153
    %v538 = vmul.f32 %v536, %v160
    %v539 = vtanh.pop %v538
    %v540 = vmul.f32 %v539, 0.5
    %v541 = vadd.f32 %v540, 0.5
    %v542 = vsel %vm159, %v539, %v541
    %v543 = vmul.f32 %v542, %v453
    %545 = vrot.lane.b32.xlu0 %v542, 64
    %v546 = vpop.permute.xlu0 %545
    %v548 = vmul.f32 %v542, %v546
    %550 = vrot.lane.b32.xlu0 %v548, 32
    %v551 = vpop.permute.xlu0 %550
    %v553 = vadd.f32 %v543, %v551
    %v554 = vtanh.pop %v553
    %556 = vrot.lane.b32.xlu0 %v554, 64
    %v557 = vpop.permute.xlu0 %556
    %v559 = vmul.f32 %v542, %v557
    %v560 = vmul.f32 %v537, %v160
    %v561 = vtanh.pop %v560
    %v562 = vmul.f32 %v561, 0.5
    %v563 = vadd.f32 %v562, 0.5
    %v564 = vsel %vm159, %v561, %v563
    %v565 = vmul.f32 %v564, %v475
    %567 = vrot.lane.b32.xlu0 %v564, 64
    %v568 = vpop.permute.xlu0 %567
    %v570 = vmul.f32 %v564, %v568
    %572 = vrot.lane.b32.xlu0 %v570, 32
    %v573 = vpop.permute.xlu0 %572
    %v575 = vadd.f32 %v565, %v573
    %v576 = vtanh.pop %v575
    %578 = vrot.lane.b32.xlu0 %v576, 64
    %v579 = vpop.permute.xlu0 %578
    %v581 = vmul.f32 %v564, %v579
    %583 = vrot.lane.b32.xlu0 %v559, 32
    %v584 = vpop.permute.xlu0 %583
    %587 = vrot.lane.b32.xlu0 %v581, 64
    %v588 = vpop.permute.xlu0 %587
    %v590 = vsel %vm188, %v584, %v588
    %v592 = vsel %vm190, %v590, 0
    %594 = vmatpush.msra.mxu0 0.0
    %595 = vmatpush.msra.mxu0 0.0
    %596 = vmatpush.msra.mxu0 0.0
    %597 = vmatpush.msra.mxu0 0.0
    %598 = vmatpush.msra.mxu0 0.0
    %599 = vmatpush.msra.mxu0 0.0
    %600 = vmatpush.msra.mxu0 0.0
    %601 = vmatpush.msra.mxu0 0.0
    %602 = vmatpush.msra.mxu0 %v149
    %603 = vmatpush.msra.mxu0 %v147
    %604 = vmatpush.msra.mxu0 %v145
    %605 = vmatpush.msra.mxu0 %v143
    %606 = vmatpush.msra.mxu0 %v141
    %607 = vmatpush.msra.mxu0 %v139
    %608 = vmatpush.msra.mxu0 %v137
    %609 = vmatpush.msra.mxu0 %v135
    %610 = vmatmul.f32.gmra.mxu0 %v592
    %v611 = vpop.f32.mrf.mxu0
    %v612 = vadd.f32 0.0, %v611
    %613 = vdwg.mxu0
    %614 = vmatpush.msra.mxu0 0.0
    %615 = vmatpush.msra.mxu0 0.0
    %616 = vmatpush.msra.mxu0 0.0
    %617 = vmatpush.msra.mxu0 0.0
    %618 = vmatpush.msra.mxu0 0.0
    %619 = vmatpush.msra.mxu0 0.0
    %620 = vmatpush.msra.mxu0 0.0
    %621 = vmatpush.msra.mxu0 0.0
    %622 = vmatpush.msra.mxu0 %v150
    %623 = vmatpush.msra.mxu0 %v148
    %624 = vmatpush.msra.mxu0 %v146
    %625 = vmatpush.msra.mxu0 %v144
    %626 = vmatpush.msra.mxu0 %v142
    %627 = vmatpush.msra.mxu0 %v140
    %628 = vmatpush.msra.mxu0 %v138
    %629 = vmatpush.msra.mxu0 %v136
    %630 = vmatmul.f32.gmra.mxu0 %v592
    %v631 = vpop.f32.mrf.mxu0
    %v632 = vadd.f32 0.0, %v631
    %633 = vdwg.mxu0
    %s634 = scalar_lea.vmem [#allocation2], 40
    %v635 = vld [vmem:[%s634] sm:$0xff]
    %v636 = vadd.f32 %v612, %v635
    %v637 = vadd.f32 %v632, %v153
    %v638 = vmul.f32 %v636, %v160
    %v639 = vtanh.pop %v638
    %v640 = vmul.f32 %v639, 0.5
    %v641 = vadd.f32 %v640, 0.5
    %v642 = vsel %vm159, %v639, %v641
    %v643 = vmul.f32 %v642, %v553
    %645 = vrot.lane.b32.xlu0 %v642, 64
    %v646 = vpop.permute.xlu0 %645
    %v648 = vmul.f32 %v642, %v646
    %650 = vrot.lane.b32.xlu0 %v648, 32
    %v651 = vpop.permute.xlu0 %650
    %v653 = vadd.f32 %v643, %v651
    %v654 = vtanh.pop %v653
    %656 = vrot.lane.b32.xlu0 %v654, 64
    %v657 = vpop.permute.xlu0 %656
    %v659 = vmul.f32 %v642, %v657
    %v660 = vmul.f32 %v637, %v160
    %v661 = vtanh.pop %v660
    %v662 = vmul.f32 %v661, 0.5
    %v663 = vadd.f32 %v662, 0.5
    %v664 = vsel %vm159, %v661, %v663
    %v665 = vmul.f32 %v664, %v575
    %667 = vrot.lane.b32.xlu0 %v664, 64
    %v668 = vpop.permute.xlu0 %667
    %v670 = vmul.f32 %v664, %v668
    %672 = vrot.lane.b32.xlu0 %v670, 32
    %v673 = vpop.permute.xlu0 %672
    %v675 = vadd.f32 %v665, %v673
    %v676 = vtanh.pop %v675
    %678 = vrot.lane.b32.xlu0 %v676, 64
    %v679 = vpop.permute.xlu0 %678
    %v681 = vmul.f32 %v664, %v679
    %683 = vrot.lane.b32.xlu0 %v659, 32
    %v684 = vpop.permute.xlu0 %683
    %687 = vrot.lane.b32.xlu0 %v681, 64
    %v688 = vpop.permute.xlu0 %687
    %v690 = vsel %vm188, %v684, %v688
    %v692 = vsel %vm190, %v690, 0
    %694 = vmatpush.msra.mxu0 0.0
    %695 = vmatpush.msra.mxu0 0.0
    %696 = vmatpush.msra.mxu0 0.0
    %697 = vmatpush.msra.mxu0 0.0
    %698 = vmatpush.msra.mxu0 0.0
    %699 = vmatpush.msra.mxu0 0.0
    %700 = vmatpush.msra.mxu0 0.0
    %701 = vmatpush.msra.mxu0 0.0
    %702 = vmatpush.msra.mxu0 %v149
    %703 = vmatpush.msra.mxu0 %v147
    %704 = vmatpush.msra.mxu0 %v145
    %705 = vmatpush.msra.mxu0 %v143
    %706 = vmatpush.msra.mxu0 %v141
    %707 = vmatpush.msra.mxu0 %v139
    %708 = vmatpush.msra.mxu0 %v137
    %709 = vmatpush.msra.mxu0 %v135
    %710 = vmatmul.f32.gmra.mxu0 %v692
    %v711 = vpop.f32.mrf.mxu0
    %v712 = vadd.f32 0.0, %v711
    %713 = vdwg.mxu0
    %714 = vmatpush.msra.mxu0 0.0
    %715 = vmatpush.msra.mxu0 0.0
    %716 = vmatpush.msra.mxu0 0.0
    %717 = vmatpush.msra.mxu0 0.0
    %718 = vmatpush.msra.mxu0 0.0
    %719 = vmatpush.msra.mxu0 0.0
    %720 = vmatpush.msra.mxu0 0.0
    %721 = vmatpush.msra.mxu0 0.0
    %722 = vmatpush.msra.mxu0 %v150
    %723 = vmatpush.msra.mxu0 %v148
    %724 = vmatpush.msra.mxu0 %v146
    %725 = vmatpush.msra.mxu0 %v144
    %726 = vmatpush.msra.mxu0 %v142
    %727 = vmatpush.msra.mxu0 %v140
    %728 = vmatpush.msra.mxu0 %v138
    %729 = vmatpush.msra.mxu0 %v136
    %730 = vmatmul.f32.gmra.mxu0 %v692
    %v731 = vpop.f32.mrf.mxu0
    %v732 = vadd.f32 0.0, %v731
    %733 = vdwg.mxu0
    %s734 = scalar_lea.vmem [#allocation2], 48
    %v735 = vld [vmem:[%s734] sm:$0xff]
    %v736 = vadd.f32 %v712, %v735
    %v737 = vadd.f32 %v732, %v153
    %v738 = vmul.f32 %v736, %v160
    %v739 = vtanh.pop %v738
    %v740 = vmul.f32 %v739, 0.5
    %v741 = vadd.f32 %v740, 0.5
    %v742 = vsel %vm159, %v739, %v741
    %v743 = vmul.f32 %v742, %v653
    %745 = vrot.lane.b32.xlu0 %v742, 64
    %v746 = vpop.permute.xlu0 %745
    %v748 = vmul.f32 %v742, %v746
    %750 = vrot.lane.b32.xlu0 %v748, 32
    %v751 = vpop.permute.xlu0 %750
    %v753 = vadd.f32 %v743, %v751
    %v754 = vtanh.pop %v753
    %756 = vrot.lane.b32.xlu0 %v754, 64
    %v757 = vpop.permute.xlu0 %756
    %v759 = vmul.f32 %v742, %v757
    %v760 = vmul.f32 %v737, %v160
    %v761 = vtanh.pop %v760
    %v762 = vmul.f32 %v761, 0.5
    %v763 = vadd.f32 %v762, 0.5
    %v764 = vsel %vm159, %v761, %v763
    %v765 = vmul.f32 %v764, %v675
    %767 = vrot.lane.b32.xlu0 %v764, 64
    %v768 = vpop.permute.xlu0 %767
    %v770 = vmul.f32 %v764, %v768
    %772 = vrot.lane.b32.xlu0 %v770, 32
    %v773 = vpop.permute.xlu0 %772
    %v775 = vadd.f32 %v765, %v773
    %v776 = vtanh.pop %v775
    %778 = vrot.lane.b32.xlu0 %v776, 64
    %v779 = vpop.permute.xlu0 %778
    %v781 = vmul.f32 %v764, %v779
    %783 = vrot.lane.b32.xlu0 %v759, 32
    %v784 = vpop.permute.xlu0 %783
    %787 = vrot.lane.b32.xlu0 %v781, 64
    %v788 = vpop.permute.xlu0 %787
    %v790 = vsel %vm188, %v784, %v788
    %v792 = vsel %vm190, %v790, 0
    %794 = vmatpush.msra.mxu0 0.0
    %795 = vmatpush.msra.mxu0 0.0
    %796 = vmatpush.msra.mxu0 0.0
    %797 = vmatpush.msra.mxu0 0.0
    %798 = vmatpush.msra.mxu0 0.0
    %799 = vmatpush.msra.mxu0 0.0
    %800 = vmatpush.msra.mxu0 0.0
    %801 = vmatpush.msra.mxu0 0.0
    %802 = vmatpush.msra.mxu0 %v149
    %803 = vmatpush.msra.mxu0 %v147
    %804 = vmatpush.msra.mxu0 %v145
    %805 = vmatpush.msra.mxu0 %v143
    %806 = vmatpush.msra.mxu0 %v141
    %807 = vmatpush.msra.mxu0 %v139
    %808 = vmatpush.msra.mxu0 %v137
    %809 = vmatpush.msra.mxu0 %v135
    %810 = vmatmul.f32.gmra.mxu0 %v792
    %v811 = vpop.f32.mrf.mxu0
    %v812 = vadd.f32 0.0, %v811
    %813 = vdwg.mxu0
    %814 = vmatpush.msra.mxu0 0.0
    %815 = vmatpush.msra.mxu0 0.0
    %816 = vmatpush.msra.mxu0 0.0
    %817 = vmatpush.msra.mxu0 0.0
    %818 = vmatpush.msra.mxu0 0.0
    %819 = vmatpush.msra.mxu0 0.0
    %820 = vmatpush.msra.mxu0 0.0
    %821 = vmatpush.msra.mxu0 0.0
    %822 = vmatpush.msra.mxu0 %v150
    %823 = vmatpush.msra.mxu0 %v148
    %824 = vmatpush.msra.mxu0 %v146
    %825 = vmatpush.msra.mxu0 %v144
    %826 = vmatpush.msra.mxu0 %v142
    %827 = vmatpush.msra.mxu0 %v140
    %828 = vmatpush.msra.mxu0 %v138
    %829 = vmatpush.msra.mxu0 %v136
    %830 = vmatmul.f32.gmra.mxu0 %v792
    %v831 = vpop.f32.mrf.mxu0
    %v832 = vadd.f32 0.0, %v831
    %833 = vdwg.mxu0
    %s834 = scalar_lea.vmem [#allocation2], 56
    %v835 = vld [vmem:[%s834] sm:$0xff]
    %v836 = vadd.f32 %v812, %v835
    %v837 = vadd.f32 %v832, %v153
    %v838 = vmul.f32 %v836, %v160
    %v839 = vtanh.pop %v838
    %v840 = vmul.f32 %v839, 0.5
    %v841 = vadd.f32 %v840, 0.5
    %v842 = vsel %vm159, %v839, %v841
    %v843 = vmul.f32 %v842, %v753
    %845 = vrot.lane.b32.xlu0 %v842, 64
    %v846 = vpop.permute.xlu0 %845
    %v848 = vmul.f32 %v842, %v846
    %850 = vrot.lane.b32.xlu0 %v848, 32
    %v851 = vpop.permute.xlu0 %850
    %v853 = vadd.f32 %v843, %v851
    %v854 = vtanh.pop %v853
    %856 = vrot.lane.b32.xlu0 %v854, 64
    %v857 = vpop.permute.xlu0 %856
    %v859 = vmul.f32 %v842, %v857
    %v860 = vmul.f32 %v837, %v160
    %v861 = vtanh.pop %v860
    %v862 = vmul.f32 %v861, 0.5
    %v863 = vadd.f32 %v862, 0.5
    %v864 = vsel %vm159, %v861, %v863
    %v865 = vmul.f32 %v864, %v775
    %867 = vrot.lane.b32.xlu0 %v864, 64
    %v868 = vpop.permute.xlu0 %867
    %v870 = vmul.f32 %v864, %v868
    %872 = vrot.lane.b32.xlu0 %v870, 32
    %v873 = vpop.permute.xlu0 %872
    %v875 = vadd.f32 %v865, %v873
    %v876 = vtanh.pop %v875
    %878 = vrot.lane.b32.xlu0 %v876, 64
    %v879 = vpop.permute.xlu0 %878
    %v881 = vmul.f32 %v864, %v879
    %883 = vrot.lane.b32.xlu0 %v859, 32
    %v884 = vpop.permute.xlu0 %883
    %887 = vrot.lane.b32.xlu0 %v881, 64
    %v888 = vpop.permute.xlu0 %887
    %v890 = vsel %vm188, %v884, %v888
    %v892 = vsel %vm190, %v890, 0
    %894 = vmatpush.msra.mxu0 0.0
    %895 = vmatpush.msra.mxu0 0.0
    %896 = vmatpush.msra.mxu0 0.0
    %897 = vmatpush.msra.mxu0 0.0
    %898 = vmatpush.msra.mxu0 0.0
    %899 = vmatpush.msra.mxu0 0.0
    %900 = vmatpush.msra.mxu0 0.0
    %901 = vmatpush.msra.mxu0 0.0
    %902 = vmatpush.msra.mxu0 %v150
    %903 = vmatpush.msra.mxu0 %v148
    %904 = vmatpush.msra.mxu0 %v146
    %905 = vmatpush.msra.mxu0 %v144
    %906 = vmatpush.msra.mxu0 %v142
    %907 = vmatpush.msra.mxu0 %v140
    %908 = vmatpush.msra.mxu0 %v138
    %909 = vmatpush.msra.mxu0 %v136
    %910 = vmatmul.f32.gmra.mxu0 %v892
    %v911 = vpop.f32.mrf.mxu0
    %v912 = vadd.f32 %v153, %v911
    %913 = vdwg.mxu0
    %v914 = vmul.f32 %v912, %v160
    %v915 = vtanh.pop %v914
    %v916 = vmul.f32 %v915, 0.5
    %v917 = vadd.f32 %v916, 0.5
    %v918 = vsel %vm159, %v915, %v917
    %v919 = vmul.f32 %v918, %v875
    %921 = vrot.lane.b32.xlu0 %v918, 64
    %v922 = vpop.permute.xlu0 %921
    %v924 = vmul.f32 %v918, %v922
    %926 = vrot.lane.b32.xlu0 %v924, 32
    %v927 = vpop.permute.xlu0 %926
    %v929 = vadd.f32 %v919, %v927
    %v930 = vtanh.pop %v929
    %932 = vrot.lane.b32.xlu0 %v930, 64
    %v933 = vpop.permute.xlu0 %932
    %v935 = vmul.f32 %v918, %v933
    %v936 = vld [vmem:[%s5] sm:$0xff]
    %v937 = vld [vmem:[%s5 + $0x8] sm:$0xff]
    %v938 = vld [vmem:[%s5 + $0x10] sm:$0xff]
    %v939 = vld [vmem:[%s5 + $0x18] sm:$0xff]
    %v940 = vld [vmem:[#allocation3] sm:$0x1]
    %v942 = vperm.slane %v940, 0
    %945 = vrot.lane.b32.xlu0 %v935, 32
    %v946 = vpop.permute.xlu0 %945
    %v947 = vsel %vm188, %v946, 0
    %949 = vmatpush.msra.mxu0 0.0
    %950 = vmatpush.msra.mxu0 0.0
    %951 = vmatpush.msra.mxu0 0.0
    %952 = vmatpush.msra.mxu0 0.0
    %953 = vmatpush.msra.mxu0 0.0
    %954 = vmatpush.msra.mxu0 0.0
    %955 = vmatpush.msra.mxu0 0.0
    %956 = vmatpush.msra.mxu0 0.0
    %957 = vmatpush.msra.mxu0 0.0
    %958 = vmatpush.msra.mxu0 0.0
    %959 = vmatpush.msra.mxu0 0.0
    %960 = vmatpush.msra.mxu0 0.0
    %961 = vmatpush.msra.mxu0 %v939
    %962 = vmatpush.msra.mxu0 %v938
    %963 = vmatpush.msra.mxu0 %v937
    %964 = vmatpush.msra.mxu0 %v936
    %965 = vmatmul.f32.gmra.mxu0 %v947
    %v966 = vpop.f32.mrf.mxu0
    %v967 = vadd.f32 %v942, %v966
    %968 = vdwg.mxu0
    %vm969 = vcmask 7168
    %970 = vst.msk [vmem:[%s7] sm:$0xff] %vm969, %v967
    // Predicated region
    $region34: #{stock_rnn_forward.1} parent=1 // pred_check
      _
    $region35: #{stock_rnn_forward.1} parent=1 // pred_check_branch
      %972 = sbr.rel (0) target = $region37
    $region36: #{stock_rnn_forward.1} parent=1 // pred_region
      _
    $region37: #{stock_rnn_forward.1} parent=1 // pred_fallthru
      _
    // Predicated region
    $region38: #{stock_rnn_forward.1} parent=1 // pred_check
      _
    $region39: #{stock_rnn_forward.1} parent=1 // pred_check_branch
      %974 = sbr.rel (0) target = $region41
    $region40: #{stock_rnn_forward.1} parent=1 // pred_region
      _
    $region41: #{stock_rnn_forward.1} parent=1 // pred_fallthru
      _
    %975 = vsyncpa [#allocation5], 1

</llo_original>
